<compile_context>
chip_gen: v6e
topology: v6e:2x2x1
jax: 0.10.0
libtpu: 0.0.40
codegen_flags: <defaults>
</compile_context>

<pallas_src>
import jax
import jax.numpy as jnp
from jax import lax
from jax.experimental import pallas as pl
from jax.experimental.pallas import tpu as pltpu

INPUT_DIM = 32          # d_model (constructor argument of TransformerModel)
DIM_FF = 2048           # nn.TransformerEncoderLayer default dim_feedforward
BATCH = 32
EPS = 1e-5              # layer_norm_eps default
_HI = jax.lax.Precision.HIGHEST


def _nhead(input_dim):
    for possible_nhead in range(8, 0, -1):
        if input_dim % possible_nhead == 0:
            return possible_nhead
    return 1


NHEAD = _nhead(INPUT_DIM)

# Packed-slab row layout (all (1, D) vectors share one resident VMEM tile).
_ROW_BATTN, _ROW_G1, _ROW_BE1, _ROW_B2, _ROW_GW = 0, 1, 2, 3, 4
_SLAB_ROWS = 8          # padded to a full sublane tile


def _layer_norm(h, gamma, beta):
    mu = jnp.mean(h, axis=-1, keepdims=True)
    d = h - mu
    var = jnp.mean(d * d, axis=-1, keepdims=True)
    return d * lax.rsqrt(var + EPS) * gamma + beta


def _layer_norm_normed(h):
    """LayerNorm without the affine part (affine is folded into the final fc)."""
    mu = jnp.mean(h, axis=-1, keepdims=True)
    d = h - mu
    var = jnp.mean(d * d, axis=-1, keepdims=True)
    return d * lax.rsqrt(var + EPS)


def _transformer_kernel(x_ref, w_attn_ref, w1_ref, b1_ref, w2_ref,
                        slab_ref, bf_ref, out_ref):
    x = x_ref[...]                                        # (TB, D) f32
    slab = slab_ref[...]                                  # (8, D)  f32
    b_attn = slab[_ROW_BATTN:_ROW_BATTN + 1, :]
    g1 = slab[_ROW_G1:_ROW_G1 + 1, :]
    be1 = slab[_ROW_BE1:_ROW_BE1 + 1, :]
    b2 = slab[_ROW_B2:_ROW_B2 + 1, :]
    gw = slab[_ROW_GW:_ROW_GW + 1, :]                     # g2 * wf (folded)

    # seq_len == 1  =>  attention weights are exactly 1.0; MHA == out_proj(V(x)).
    # wv @ wo is pre-folded offline, so self-attention is one bf16 matmul.
    sa = jnp.dot(x.astype(jnp.bfloat16), w_attn_ref[...],
                 preferred_element_type=jnp.float32) + b_attn

    # residual + LayerNorm 1 (dropout1 is identity in eval mode), f32 math
    h1 = _layer_norm(x + sa, g1, be1)

    # feed-forward: linear1 -> ReLU -> linear2 (inner dropout = identity)
    ff = jnp.dot(h1.astype(jnp.bfloat16), w1_ref[...],
                 preferred_element_type=jnp.float32) + b1_ref[...]
    ff = jnp.maximum(ff, 0.0).astype(jnp.bfloat16)        # halves the (TB, F) temp
    ff = jnp.dot(ff, w2_ref[...], preferred_element_type=jnp.float32) + b2

    # residual + LayerNorm 2; its affine + final nn.Linear(D, 1) are folded into
    # a VPU multiply + lane reduce (no N=1 MXU matmul):  y = sum(h2n * g2*wf) + c
    h2n = _layer_norm_normed(h1 + ff)
    y = jnp.sum(h2n * gw, axis=-1) + bf_ref[0, 0]         # (TB,)
    out_ref[...] = y[None, :]                             # lane-dense (1, TB) store
    # TODO(synk): training-mode dropout omitted (eval/identity); would need
    # pltpu.prng_seed + pltpu.prng_random_bits masking.


def _pick_row_tile(B):
    # Single grid step for small batches (per-step overhead dominates there);
    # cap at 1024 rows so the (row_tile, 2048) FF intermediate (bf16 + f32
    # accumulator) stays inside v7x's 32 MiB scoped-VMEM / 64 MiB physical VMEM,
    # and so large batches keep >= 2 parallel steps for v7x's two TensorCores.
    if B <= 1024:
        return B
    for t in (1024, 512, 256, 128, 64, 32, 16, 8):
        if B % t == 0:
            return t
    # TODO(synk): ragged batch sizes would need wrapper-side padding.
    raise ValueError(f"batch size {B} is not divisible by a supported row tile")


def prepare_params(p):
    """Fold / pack torch-layout params into the kernel's inputs (all offline)."""
    d = p["wv"].shape[0]
    w_attn = jnp.dot(p["wv"], p["wo"], precision=_HI)               # (D, D)
    b_attn = jnp.dot(p["bv"], p["wo"], precision=_HI) + p["bo"]     # (1, D)
    wf_row = p["wf"].reshape(1, d)                                  # (1, D)
    gw = p["g2"] * wf_row                                           # LN2 scale folded
    bf = jnp.dot(p["be2"], p["wf"], precision=_HI) + p["bf"]        # (1, 1) scalar

    slab = jnp.zeros((_SLAB_ROWS, d), jnp.float32)
    slab = slab.at[_ROW_BATTN].set(b_attn[0])
    slab = slab.at[_ROW_G1].set(p["g1"][0])
    slab = slab.at[_ROW_BE1].set(p["be1"][0])
    slab = slab.at[_ROW_B2].set(p["b2"][0])
    slab = slab.at[_ROW_GW].set(gw[0])

    return dict(
        w_attn=w_attn.astype(jnp.bfloat16),
        w1=p["w1"].astype(jnp.bfloat16),
        b1=p["b1"].astype(jnp.float32),
        w2=p["w2"].astype(jnp.bfloat16),
        slab=slab,
        bf=bf.astype(jnp.float32),
    )


def transformer_model(x, kparams, *, row_tile=None):
    """x: (B, input_dim) float32. kparams: output of prepare_params()."""
    B, D = x.shape
    F = kparams["w1"].shape[1]
    if row_tile is None:
        row_tile = _pick_row_tile(B)
    assert B % row_tile == 0, (B, row_tile)
    grid = (B // row_tile,)

    def resident(shape):
        # constant block index -> DMA'd once, stays VMEM-resident across the grid
        return pl.BlockSpec(shape, lambda i: (0, 0))

    in_specs = [
        pl.BlockSpec((row_tile, D), lambda i: (i, 0)),          # x (streamed)
        resident((D, D)),                                       # w_attn (bf16)
        resident((D, F)),                                       # w1     (bf16)
        resident((1, F)),                                       # b1     (f32)
        resident((F, D)),                                       # w2     (bf16)
        resident((_SLAB_ROWS, D)),                              # packed small params
        pl.BlockSpec(memory_space=pltpu.MemorySpace.SMEM),      # folded final bias
    ]
    # Lane-dense output: one (1, row_tile) row per grid step; wrapper reshapes.
    out_specs = pl.BlockSpec((1, row_tile), lambda i: (i, 0))

    flops = 2 * B * D * D + 4 * B * D * F + 2 * B * D
    bytes_accessed = (4 * B * D + 2 * (D * D + 2 * D * F)
                      + 4 * (F + _SLAB_ROWS * D + 1) + 4 * B)

    y = pl.pallas_call(
        _transformer_kernel,
        out_shape=jax.ShapeDtypeStruct((B // row_tile, row_tile), jnp.float32),
        grid=grid,
        in_specs=in_specs,
        out_specs=out_specs,
        compiler_params=pltpu.CompilerParams(
            dimension_semantics=("parallel",),
            vmem_limit_bytes=32 * 1024 * 1024,
        ),
        cost_estimate=pl.CostEstimate(
            flops=flops, transcendentals=2 * B, bytes_accessed=bytes_accessed),
    )(x, kparams["w_attn"], kparams["w1"], kparams["b1"], kparams["w2"],
      kparams["slab"], kparams["bf"])
    return y.reshape(B, 1)


def init_params(key, d=INPUT_DIM, f=DIM_FF):
    """Synthetic init mimicking nn.Linear uniform(-1/sqrt(in), +1/sqrt(in))."""
    keys = jax.random.split(key, 11)

    def linear(k, fan_in, fan_out):
        kw, kb = jax.random.split(k)
        bound = 1.0 / jnp.sqrt(jnp.float32(fan_in))
        w_t = jax.random.uniform(kw, (fan_in, fan_out), jnp.float32, -bound, bound)
        b = jax.random.uniform(kb, (1, fan_out), jnp.float32, -bound, bound)
        return w_t, b

    wq, bq = linear(keys[0], d, d)      # mathematically dead (kept for reference)
    wk, bk = linear(keys[1], d, d)      # mathematically dead (kept for reference)
    wv, bv = linear(keys[2], d, d)
    wo, bo = linear(keys[3], d, d)
    w1, b1 = linear(keys[4], d, f)
    w2, b2 = linear(keys[5], f, d)
    wf, bf = linear(keys[6], d, 1)
    # LayerNorm affine params (randomized to exercise the math; torch init is 1/0)
    g1 = 1.0 + 0.1 * jax.random.normal(keys[7], (1, d), jnp.float32)
    be1 = 0.1 * jax.random.normal(keys[8], (1, d), jnp.float32)
    g2 = 1.0 + 0.1 * jax.random.normal(keys[9], (1, d), jnp.float32)
    be2 = 0.1 * jax.random.normal(keys[10], (1, d), jnp.float32)
    return dict(wq=wq, bq=bq, wk=wk, bk=bk, wv=wv, bv=bv, wo=wo, bo=bo,
                w1=w1, b1=b1, w2=w2, b2=b2,
                g1=g1, be1=be1, g2=g2, be2=be2, wf=wf, bf=bf)


def reference(x, p, nhead=NHEAD):
    """Full-fidelity f32 reference, including the (mathematically dead) Q/K/softmax."""
    B, D = x.shape
    hd = D // nhead
    q = jnp.dot(x, p["wq"], precision=_HI) + p["bq"]
    k = jnp.dot(x, p["wk"], precision=_HI) + p["bk"]
    v = jnp.dot(x, p["wv"], precision=_HI) + p["bv"]
    qh = q.reshape(B, nhead, 1, hd)
    kh = k.reshape(B, nhead, 1, hd)
    vh = v.reshape(B, nhead, 1, hd)
    scores = jnp.einsum("bhqd,bhkd->bhqk", qh, kh,
                        precision=_HI) / jnp.sqrt(jnp.float32(hd))
    attn = jax.nn.softmax(scores, axis=-1)          # size-1 key axis -> exactly 1
    ao = jnp.einsum("bhqk,bhkd->bhqd", attn, vh, precision=_HI).reshape(B, D)
    sa = jnp.dot(ao, p["wo"], precision=_HI) + p["bo"]
    h1 = _layer_norm(x + sa, p["g1"], p["be1"])
    ff = jnp.maximum(jnp.dot(h1, p["w1"], precision=_HI) + p["b1"], 0.0)
    ff = jnp.dot(ff, p["w2"], precision=_HI) + p["b2"]
    h2 = _layer_norm(h1 + ff, p["g2"], p["be2"])
    return jnp.dot(h2, p["wf"], precision=_HI) + p["bf"]


def reference_bf16(x, kp):
    """Plain-JAX replica of the kernel math (bf16 matmul operands, f32 accum/LN)."""
    slab = kp["slab"]
    b_attn, g1, be1, b2, gw = (slab[i:i + 1] for i in range(5))
    sa = jnp.dot(x.astype(jnp.bfloat16), kp["w_attn"],
                 preferred_element_type=jnp.float32) + b_attn
    h1 = _layer_norm(x + sa, g1, be1)
    ff = jnp.dot(h1.astype(jnp.bfloat16), kp["w1"],
                 preferred_element_type=jnp.float32) + kp["b1"]
    ff = jnp.maximum(ff, 0.0).astype(jnp.bfloat16)
    ff = jnp.dot(ff, kp["w2"], preferred_element_type=jnp.float32) + b2
    h2n = _layer_norm_normed(h1 + ff)
    return jnp.sum(h2n * gw, axis=-1, keepdims=True) + kp["bf"][0, 0]


if __name__ == "__main__":
    key = jax.random.PRNGKey(0)
    kx, kp = jax.random.split(key)
    x = jax.random.normal(kx, (BATCH, INPUT_DIM), jnp.float32)
    params = init_params(kp)
    kparams = prepare_params(params)

    y = transformer_model(x, kparams)
    y = jax.block_until_ready(y)
    assert y.shape == (BATCH, 1), y.shape

    # Tight check against a JAX replica of the kernel's bf16-matmul math.
    y_bf = reference_bf16(x, kparams)
    err_bf = float(jnp.max(jnp.abs(y - y_bf)))
    assert jnp.allclose(y, y_bf, atol=2e-3, rtol=2e-3), err_bf

    # Sanity check against the full-fidelity f32 reference (incl. dead Q/K path).
    y_ref = reference(x, params)
    err_f32 = float(jnp.max(jnp.abs(y - y_ref)))
    assert jnp.allclose(y, y_ref, atol=5e-2, rtol=5e-2), err_f32

    print("KERNEL_OK")
</pallas_src>

<mosaic_0001>
module attributes {stable_mosaic.version = 11 : i64} {
  func.func @_transformer_kernel(%arg0: i32, %arg1: memref<32x32xf32, #tpu.memory_space<vmem>>, %arg2: memref<32x32xbf16, #tpu.memory_space<vmem>>, %arg3: memref<32x2048xbf16, #tpu.memory_space<vmem>>, %arg4: memref<1x2048xf32, #tpu.memory_space<vmem>>, %arg5: memref<2048x32xbf16, #tpu.memory_space<vmem>>, %arg6: memref<8x32xf32, #tpu.memory_space<vmem>>, %arg7: memref<1x1xf32, #tpu.memory_space<smem>>, %arg8: memref<1x32xf32, #tpu.memory_space<vmem>>) attributes {dimension_semantics = [#tpu.dimension_semantics<parallel>], iteration_bounds = array<i64: 1>, scalar_prefetch = 0 : i64, scratch_operands = 0 : i64, tpu.core_type = #tpu.core_type<tc>, window_params = [{transform_indices = @transform_0, window_bounds = array<i64: 32, 32>}, {pipeline_mode = #tpu.pipeline_mode<synchronous>, transform_indices = @transform_1, window_bounds = array<i64: 32, 32>}, {pipeline_mode = #tpu.pipeline_mode<synchronous>, transform_indices = @transform_2, window_bounds = array<i64: 32, 2048>}, {pipeline_mode = #tpu.pipeline_mode<synchronous>, transform_indices = @transform_3, window_bounds = array<i64: 1, 2048>}, {pipeline_mode = #tpu.pipeline_mode<synchronous>, transform_indices = @transform_4, window_bounds = array<i64: 2048, 32>}, {pipeline_mode = #tpu.pipeline_mode<synchronous>, transform_indices = @transform_5, window_bounds = array<i64: 8, 32>}, {transform_indices = @transform_6, window_bounds = array<i64: 1, 1>}, {transform_indices = @transform_7, window_bounds = array<i64: 1, 32>}]} {
    %c0 = arith.constant 0 : index
    %c0_0 = arith.constant 0 : index
    %0 = vector.load %arg1[%c0, %c0_0] : memref<32x32xf32, #tpu.memory_space<vmem>>, vector<32x32xf32>
    %c0_1 = arith.constant 0 : index
    %c0_2 = arith.constant 0 : index
    %1 = vector.load %arg6[%c0_1, %c0_2] : memref<8x32xf32, #tpu.memory_space<vmem>>, vector<8x32xf32>
    %2 = vector.extract_strided_slice %1 {offsets = [0, 0], sizes = [1, 32], strides = [1, 1]} : vector<8x32xf32> to vector<1x32xf32>
    %3 = vector.extract_strided_slice %1 {offsets = [1, 0], sizes = [1, 32], strides = [1, 1]} : vector<8x32xf32> to vector<1x32xf32>
    %4 = vector.extract_strided_slice %1 {offsets = [2, 0], sizes = [1, 32], strides = [1, 1]} : vector<8x32xf32> to vector<1x32xf32>
    %5 = vector.extract_strided_slice %1 {offsets = [3, 0], sizes = [1, 32], strides = [1, 1]} : vector<8x32xf32> to vector<1x32xf32>
    %6 = vector.extract_strided_slice %1 {offsets = [4, 0], sizes = [1, 32], strides = [1, 1]} : vector<8x32xf32> to vector<1x32xf32>
    %7 = arith.truncf %0 : vector<32x32xf32> to vector<32x32xbf16>
    %c0_3 = arith.constant 0 : index
    %c0_4 = arith.constant 0 : index
    %8 = vector.load %arg2[%c0_3, %c0_4] : memref<32x32xbf16, #tpu.memory_space<vmem>>, vector<32x32xbf16>
    %cst = arith.constant dense<0.000000e+00> : vector<32x32xf32>
    %9 = tpu.matmul %7, %8, %cst {dimension_numbers = #tpu.dot_dimension_numbers<[1], [0], [0], [1], [0, 0, 1, 1], [], []>} : vector<32x32xbf16>, vector<32x32xbf16>, vector<32x32xf32> -> vector<32x32xf32>
    %10 = vector.broadcast %2 : vector<1x32xf32> to vector<32x32xf32>
    %11 = arith.addf %9, %10 : vector<32x32xf32>
    %12 = arith.addf %0, %11 : vector<32x32xf32>
    %cst_5 = arith.constant dense<0.000000e+00> : vector<32xf32>
    %13 = vector.multi_reduction <add>, %12, %cst_5 [1] : vector<32x32xf32> to vector<32xf32>
    %14 = vector.shape_cast %13 : vector<32xf32> to vector<32x1xf32>
    %cst_6 = arith.constant 3.200000e+01 : f32
    %15 = vector.broadcast %cst_6 : f32 to vector<32x1xf32>
    %16 = arith.divf %14, %15 : vector<32x1xf32>
    %17 = vector.broadcast %16 : vector<32x1xf32> to vector<32x32xf32>
    %18 = arith.subf %12, %17 : vector<32x32xf32>
    %19 = arith.mulf %18, %18 : vector<32x32xf32>
    %cst_7 = arith.constant dense<0.000000e+00> : vector<32xf32>
    %20 = vector.multi_reduction <add>, %19, %cst_7 [1] : vector<32x32xf32> to vector<32xf32>
    %21 = vector.shape_cast %20 : vector<32xf32> to vector<32x1xf32>
    %cst_8 = arith.constant 3.200000e+01 : f32
    %22 = vector.broadcast %cst_8 : f32 to vector<32x1xf32>
    %23 = arith.divf %21, %22 : vector<32x1xf32>
    %cst_9 = arith.constant 9.99999974E-6 : f32
    %24 = vector.broadcast %cst_9 : f32 to vector<32x1xf32>
    %25 = arith.addf %23, %24 : vector<32x1xf32>
    %26 = math.rsqrt %25 : vector<32x1xf32>
    %27 = vector.broadcast %26 : vector<32x1xf32> to vector<32x32xf32>
    %28 = arith.mulf %18, %27 : vector<32x32xf32>
    %29 = vector.broadcast %3 : vector<1x32xf32> to vector<32x32xf32>
    %30 = arith.mulf %28, %29 : vector<32x32xf32>
    %31 = vector.broadcast %4 : vector<1x32xf32> to vector<32x32xf32>
    %32 = arith.addf %30, %31 : vector<32x32xf32>
    %33 = arith.truncf %32 : vector<32x32xf32> to vector<32x32xbf16>
    %c0_10 = arith.constant 0 : index
    %c0_11 = arith.constant 0 : index
    %34 = vector.load %arg3[%c0_10, %c0_11] : memref<32x2048xbf16, #tpu.memory_space<vmem>>, vector<32x2048xbf16>
    %cst_12 = arith.constant dense<0.000000e+00> : vector<32x2048xf32>
    %35 = tpu.matmul %33, %34, %cst_12 {dimension_numbers = #tpu.dot_dimension_numbers<[1], [0], [0], [1], [0, 0, 1, 1], [], []>} : vector<32x32xbf16>, vector<32x2048xbf16>, vector<32x2048xf32> -> vector<32x2048xf32>
    %c0_13 = arith.constant 0 : index
    %c0_14 = arith.constant 0 : index
    %36 = vector.load %arg4[%c0_13, %c0_14] : memref<1x2048xf32, #tpu.memory_space<vmem>>, vector<1x2048xf32>
    %37 = vector.broadcast %36 : vector<1x2048xf32> to vector<32x2048xf32>
    %38 = arith.addf %35, %37 : vector<32x2048xf32>
    %cst_15 = arith.constant 0.000000e+00 : f32
    %39 = vector.broadcast %cst_15 : f32 to vector<32x2048xf32>
    %40 = arith.maximumf %38, %39 : vector<32x2048xf32>
    %41 = arith.truncf %40 : vector<32x2048xf32> to vector<32x2048xbf16>
    %c0_16 = arith.constant 0 : index
    %c0_17 = arith.constant 0 : index
    %42 = vector.load %arg5[%c0_16, %c0_17] : memref<2048x32xbf16, #tpu.memory_space<vmem>>, vector<2048x32xbf16>
    %cst_18 = arith.constant dense<0.000000e+00> : vector<32x32xf32>
    %43 = tpu.matmul %41, %42, %cst_18 {dimension_numbers = #tpu.dot_dimension_numbers<[1], [0], [0], [1], [0, 0, 1, 1], [], []>} : vector<32x2048xbf16>, vector<2048x32xbf16>, vector<32x32xf32> -> vector<32x32xf32>
    %44 = vector.broadcast %5 : vector<1x32xf32> to vector<32x32xf32>
    %45 = arith.addf %43, %44 : vector<32x32xf32>
    %46 = arith.addf %32, %45 : vector<32x32xf32>
    %cst_19 = arith.constant dense<0.000000e+00> : vector<32xf32>
    %47 = vector.multi_reduction <add>, %46, %cst_19 [1] : vector<32x32xf32> to vector<32xf32>
    %48 = vector.shape_cast %47 : vector<32xf32> to vector<32x1xf32>
    %cst_20 = arith.constant 3.200000e+01 : f32
    %49 = vector.broadcast %cst_20 : f32 to vector<32x1xf32>
    %50 = arith.divf %48, %49 : vector<32x1xf32>
    %51 = vector.broadcast %50 : vector<32x1xf32> to vector<32x32xf32>
    %52 = arith.subf %46, %51 : vector<32x32xf32>
    %53 = arith.mulf %52, %52 : vector<32x32xf32>
    %cst_21 = arith.constant dense<0.000000e+00> : vector<32xf32>
    %54 = vector.multi_reduction <add>, %53, %cst_21 [1] : vector<32x32xf32> to vector<32xf32>
    %55 = vector.shape_cast %54 : vector<32xf32> to vector<32x1xf32>
    %cst_22 = arith.constant 3.200000e+01 : f32
    %56 = vector.broadcast %cst_22 : f32 to vector<32x1xf32>
    %57 = arith.divf %55, %56 : vector<32x1xf32>
    %cst_23 = arith.constant 9.99999974E-6 : f32
    %58 = vector.broadcast %cst_23 : f32 to vector<32x1xf32>
    %59 = arith.addf %57, %58 : vector<32x1xf32>
    %60 = math.rsqrt %59 : vector<32x1xf32>
    %61 = vector.broadcast %60 : vector<32x1xf32> to vector<32x32xf32>
    %62 = arith.mulf %52, %61 : vector<32x32xf32>
    %63 = vector.broadcast %6 : vector<1x32xf32> to vector<32x32xf32>
    %64 = arith.mulf %62, %63 : vector<32x32xf32>
    %cst_24 = arith.constant dense<0.000000e+00> : vector<32xf32>
    %65 = vector.multi_reduction <add>, %64, %cst_24 [1] : vector<32x32xf32> to vector<32xf32>
    %c0_25 = arith.constant 0 : index
    %c0_26 = arith.constant 0 : index
    %66 = memref.load %arg7[%c0_25, %c0_26] : memref<1x1xf32, #tpu.memory_space<smem>>
    %67 = vector.broadcast %66 : f32 to vector<32xf32>
    %68 = arith.addf %65, %67 : vector<32xf32>
    %69 = vector.shape_cast %68 : vector<32xf32> to vector<1x32xf32>
    %c0_27 = arith.constant 0 : index
    %c0_28 = arith.constant 0 : index
    %70 = vector.load %arg8[%c0_27, %c0_28] : memref<1x32xf32, #tpu.memory_space<vmem>>, vector<1x32xf32>
    tpu.vector_store %arg8[%c0_27, %c0_28], %69 {strides = array<i32>} : memref<1x32xf32, #tpu.memory_space<vmem>>, vector<1x32xf32>,
    return
  }
  func.func @transform_0(%arg0: i32) -> (i32, i32) {
    %c0_i32 = arith.constant 0 : i32
    %c0_i32_0 = arith.constant 0 : i32
    return %arg0, %c0_i32 : i32, i32
  }
  func.func @transform_1(%arg0: i32) -> (i32, i32) {
    %c0_i32 = arith.constant 0 : i32
    %c0_i32_0 = arith.constant 0 : i32
    %c0_i32_1 = arith.constant 0 : i32
    return %c0_i32, %c0_i32_0 : i32, i32
  }
  func.func @transform_2(%arg0: i32) -> (i32, i32) {
    %c0_i32 = arith.constant 0 : i32
    %c0_i32_0 = arith.constant 0 : i32
    %c0_i32_1 = arith.constant 0 : i32
    return %c0_i32, %c0_i32_0 : i32, i32
  }
  func.func @transform_3(%arg0: i32) -> (i32, i32) {
    %c0_i32 = arith.constant 0 : i32
    %c0_i32_0 = arith.constant 0 : i32
    %c0_i32_1 = arith.constant 0 : i32
    return %c0_i32, %c0_i32_0 : i32, i32
  }
  func.func @transform_4(%arg0: i32) -> (i32, i32) {
    %c0_i32 = arith.constant 0 : i32
    %c0_i32_0 = arith.constant 0 : i32
    %c0_i32_1 = arith.constant 0 : i32
    return %c0_i32, %c0_i32_0 : i32, i32
  }
  func.func @transform_5(%arg0: i32) -> (i32, i32) {
    %c0_i32 = arith.constant 0 : i32
    %c0_i32_0 = arith.constant 0 : i32
    %c0_i32_1 = arith.constant 0 : i32
    return %c0_i32, %c0_i32_0 : i32, i32
  }
  func.func @transform_6(%arg0: i32) -> (i32, i32) {
    %c0_i32 = arith.constant 0 : i32
    %c0_i32_0 = arith.constant 0 : i32
    %c0_i32_1 = arith.constant 0 : i32
    return %c0_i32, %c0_i32_0 : i32, i32
  }
  func.func @transform_7(%arg0: i32) -> (i32, i32) {
    %c0_i32 = arith.constant 0 : i32
    %c0_i32_0 = arith.constant 0 : i32
    return %arg0, %c0_i32 : i32, i32
  }
}

</mosaic_0001>

<llo_original>
// kernel: tpu_custom_call.1
$region0: #{tpu_custom_call.1}
  #allocation0 [shape = 'u32[]', space=smem, size = 0x4, offset = 0x4, fixed_abs, tag = 'smem constant byte address 0x4 - core index']
  #allocation1 [shape = 'u32[144,128]{1,0:T(1,128)}', space=vmem, size = 0x12000, scoped, tag = 'internal scratch']
  #allocation2 [shape = 'f32[1,1]{1,0:T(1,128)S(6)}', space=smem, size = 0x200, scoped, tag = 'scoped memory for tpu_custom_call.1']
  %s0 = inlined_call_operand.vmem [shape: f32[32,32], index: 0, kind: input, shape index: {}]
  %s1 = inlined_call_operand.vmem [shape: bf16[32,32], index: 1, kind: input, shape index: {}]
  %s2 = inlined_call_operand.vmem [shape: bf16[32,2048], index: 2, kind: input, shape index: {}]
  %s3 = inlined_call_operand.vmem [shape: f32[1,2048], index: 3, kind: input, shape index: {}]
  %s4 = inlined_call_operand.vmem [shape: bf16[2048,32], index: 4, kind: input, shape index: {}]
  %s5 = inlined_call_operand.vmem [shape: f32[8,32], index: 5, kind: input, shape index: {}]
  %s6 = inlined_call_operand.<no memory space> [shape: f32[1,1], index: 6, kind: input, shape index: {}]
  %s7 = inlined_call_operand.hbm [shape: f32[1,32], index: 7, kind: output, shape index: {}]
  %s8 = sld [smem:[#allocation0]]
  $region38: #{tpu_custom_call.1} parent=0
    _
  %s10 = ssub.s32 1, %s8
  %s11 = scalar_select 0, %s10, %s8
  %12 = sst [smem:[#allocation2]] %s6
  $region1: #{tpu_custom_call.1} parent=0
    #allocation3 [shape = 'u8[512]{0}', space=vmem, size = 0x400, scoped, tag = 'output window, operand 0, single buffered']
    #allocation4 [shape = 's32[1]{0}', space=sflag, size = 0x4, scoped, tag = 'scoped memory for tpu_custom_call.1']
    %13 = vsyncpa [#allocation4], 0
    // Predicated region
    $region2: #{tpu_custom_call.1} parent=1 // pred_check
      _
    $region3: #{tpu_custom_call.1} parent=1 // pred_check_branch
      %15 = sbr.rel (0) target = $region5
    $region4: #{tpu_custom_call.1} parent=1 // pred_region
      _
    $region5: #{tpu_custom_call.1} parent=1 // pred_fallthru
      _
    // Predicated region
    $region6: #{tpu_custom_call.1} parent=1 // pred_check
      _
    $region7: #{tpu_custom_call.1} parent=1 // pred_check_branch
      %17 = sbr.rel (0) target = $region9
    $region8: #{tpu_custom_call.1} parent=1 // pred_region
      _
    $region9: #{tpu_custom_call.1} parent=1 // pred_fallthru
      _
    // Predicated region
    $region10: #{tpu_custom_call.1} parent=1 // pred_check
      _
    $region11: #{tpu_custom_call.1} parent=1 // pred_check_branch
      %19 = sbr.rel (0) target = $region13
    $region12: #{tpu_custom_call.1} parent=1 // pred_region
      _
    $region13: #{tpu_custom_call.1} parent=1 // pred_fallthru
      _
    // Predicated region
    $region14: #{tpu_custom_call.1} parent=1 // pred_check
      _
    $region15: #{tpu_custom_call.1} parent=1 // pred_check_branch
      %21 = sbr.rel (0) target = $region17
    $region16: #{tpu_custom_call.1} parent=1 // pred_region
      _
    $region17: #{tpu_custom_call.1} parent=1 // pred_fallthru
      _
    // Predicated region
    $region18: #{tpu_custom_call.1} parent=1 // pred_check
      _
    $region19: #{tpu_custom_call.1} parent=1 // pred_check_branch
      %23 = sbr.rel (0) target = $region21
    $region20: #{tpu_custom_call.1} parent=1 // pred_region
      _
    $region21: #{tpu_custom_call.1} parent=1 // pred_fallthru
      _
    // Predicated region
    $region22: #{tpu_custom_call.1} parent=1 // pred_check
      _
    $region23: #{tpu_custom_call.1} parent=1 // pred_check_branch
      %25 = sbr.rel (0) target = $region25
    $region24: #{tpu_custom_call.1} parent=1 // pred_region
      _
    $region25: #{tpu_custom_call.1} parent=1 // pred_fallthru
      _
    // Predicated region
    $region26: #{tpu_custom_call.1} parent=1 // pred_check
      _
    $region27: #{tpu_custom_call.1} parent=1 // pred_check_branch
      %27 = sbr.rel (0) target = $region29
    $region28: #{tpu_custom_call.1} parent=1 // pred_region
      _
    $region29: #{tpu_custom_call.1} parent=1 // pred_fallthru
      _
    %v29 = vld [vmem:[%s0] sm:$0xff]
    %v30 = vld [vmem:[%s0 + $0x8] sm:$0xff]
    %v31 = vld [vmem:[%s0 + $0x10] sm:$0xff]
    %v32 = vld [vmem:[%s0 + $0x18] sm:$0xff]
    %v33 = vld [vmem:[%s5] sm:$0xff]
    %v34 = vpack.c.bf16 %v30, %v29
    %v35 = vpack.c.bf16 %v32, %v31
    %v36 = vld [vmem:[%s1] sm:$0xf]
    %v37 = vld [vmem:[%s1 + $0x4] sm:$0xf]
    %v38 = vld [vmem:[%s1 + $0x8] sm:$0xf]
    %v39 = vld [vmem:[%s1 + $0xc] sm:$0xf]
    %v40 = vlaneseq
    %v41 = vshrl.u32 %v40, 7
    %v42 = vsub.s32 0, %v41
    %v43 = vrot.slane %v33, %v42
    %v48 = vunpack.c.l.b16 %v36
    %v49 = vunpack.c.l.b16 %v37
    %v50 = vunpack.c.l.b16 %v38
    %v51 = vunpack.c.l.b16 %v39
    %v52 = vpack.c.b16 %v49, %v48
    %v53 = vpack.c.b16 %v51, %v50
    %vm56 = vcmask 261120
    %v58 = vsel %vm56, %v34, 0
    %v61 = vsel %vm56, %v35, 0
    %63 = vmatprep.subr.bf16.mxu0 0
    %64 = vmatpush1.bf16.msra.mxu0 0
    %65 = vmatprep.subr.bf16.mxu0 0
    %66 = vmatpush1.bf16.msra.mxu0 0
    %67 = vmatprep.subr.bf16.mxu0 0
    %68 = vmatpush1.bf16.msra.mxu0 0
    %69 = vmatprep.subr.bf16.mxu0 0
    %70 = vmatpush1.bf16.msra.mxu0 0
    %71 = vmatprep.subr.bf16.mxu0 0
    %72 = vmatpush1.bf16.msra.mxu0 0
    %73 = vmatprep.subr.bf16.mxu0 0
    %74 = vmatpush1.bf16.msra.mxu0 0
    %75 = vmatprep.subr.bf16.mxu0 0
    %76 = vmatpush1.bf16.msra.mxu0 %v53
    %77 = vmatprep.subr.bf16.mxu0 0
    %78 = vmatpush1.bf16.msra.mxu0 %v52
    %79 = vmatprep.subr.bf16.mxu0 0
    %80 = vmatpush2.bf16.msra.mxu0 0
    %81 = vmatprep.subr.bf16.mxu0 0
    %82 = vmatpush2.bf16.msra.mxu0 0
    %83 = vmatprep.subr.bf16.mxu0 0
    %84 = vmatpush2.bf16.msra.mxu0 0
    %85 = vmatprep.subr.bf16.mxu0 0
    %86 = vmatpush2.bf16.msra.mxu0 0
    %87 = vmatprep.subr.bf16.mxu0 0
    %88 = vmatpush2.bf16.msra.mxu0 0
    %89 = vmatprep.subr.bf16.mxu0 0
    %90 = vmatpush2.bf16.msra.mxu0 0
    %91 = vmatprep.subr.bf16.mxu0 0
    %92 = vmatpush2.bf16.msra.mxu0 0
    %93 = vmatprep.subr.bf16.mxu0 0
    %94 = vmatpush2.bf16.msra.mxu0 0
    %95 = vmatprep.mubr.bf16.mxu0 0
    %96 = vmatmul.mubr.bf16.gmra.mxu0 %v58
    %v97 = vpop.f32.mrf.mxu0
    %v98 = vadd.f32 %v43, %v97
    %v99 = vpop.f32.mrf.mxu0
    %v100 = vpop.f32.mrf.mxu0
    %v101 = vadd.f32 %v43, %v100
    %v102 = vpop.f32.mrf.mxu0
    %103 = vmatprep.mubr.bf16.mxu0 0
    %104 = vmatmul.mubr.bf16.gmra.mxu0 %v61
    %v105 = vpop.f32.mrf.mxu0
    %v106 = vadd.f32 %v43, %v105
    %v107 = vpop.f32.mrf.mxu0
    %v108 = vpop.f32.mrf.mxu0
    %v109 = vadd.f32 %v43, %v108
    %v110 = vpop.f32.mrf.mxu0
    %111 = vdwg.mxu0
    %v112 = vadd.f32 %v29, %v98
    %v113 = vadd.f32 %v30, %v101
    %v114 = vadd.f32 %v31, %v106
    %v115 = vadd.f32 %v32, %v109
    %v116 = vsel %vm56, %v112, 0.0
    %117 = vadd.xlane.f32.xlu0 %v116
    %v118 = vpop.xlane.xlu0 %117
    %v119 = vsel %vm56, %v113, 0.0
    %120 = vadd.xlane.f32.xlu0 %v119
    %v121 = vpop.xlane.xlu0 %120
    %v122 = vsel %vm56, %v114, 0.0
    %123 = vadd.xlane.f32.xlu0 %v122
    %v124 = vpop.xlane.xlu0 %123
    %v125 = vsel %vm56, %v115, 0.0
    %126 = vadd.xlane.f32.xlu0 %v125
    %v127 = vpop.xlane.xlu0 %126
    %v128 = vrcp.pop 32.0
    %v129 = vmul.f32 %v118, %v128
    %v130 = vmul.f32 %v121, %v128
    %v131 = vmul.f32 %v124, %v128
    %v132 = vmul.f32 %v127, %v128
    %v133 = vsub.f32 %v112, %v129
    %v134 = vsub.f32 %v113, %v130
    %v135 = vsub.f32 %v114, %v131
    %v136 = vsub.f32 %v115, %v132
    %v137 = vmul.f32 %v133, %v133
    %v138 = vmul.f32 %v134, %v134
    %v139 = vmul.f32 %v135, %v135
    %v140 = vmul.f32 %v136, %v136
    %v141 = vsel %vm56, %v137, 0.0
    %142 = vadd.xlane.f32.xlu0 %v141
    %v143 = vpop.xlane.xlu0 %142
    %v144 = vsel %vm56, %v138, 0.0
    %145 = vadd.xlane.f32.xlu0 %v144
    %v146 = vpop.xlane.xlu0 %145
    %v147 = vsel %vm56, %v139, 0.0
    %148 = vadd.xlane.f32.xlu0 %v147
    %v149 = vpop.xlane.xlu0 %148
    %v150 = vsel %vm56, %v140, 0.0
    %151 = vadd.xlane.f32.xlu0 %v150
    %v152 = vpop.xlane.xlu0 %151
    %v153 = vmul.f32 %v143, %v128
    %v154 = vmul.f32 %v146, %v128
    %v155 = vmul.f32 %v149, %v128
    %v156 = vmul.f32 %v152, %v128
    %v157 = vadd.f32 %v153, 1e-05
    %v158 = vadd.f32 %v154, 1e-05
    %v159 = vadd.f32 %v155, 1e-05
    %v160 = vadd.f32 %v156, 1e-05
    %v161 = vrsqrt.pop %v157
    %v162 = vrsqrt.pop %v158
    %v163 = vrsqrt.pop %v159
    %v164 = vrsqrt.pop %v160
    %v165 = vmul.f32 %v133, %v161
    %v166 = vmul.f32 %v134, %v162
    %v167 = vmul.f32 %v135, %v163
    %v168 = vmul.f32 %v136, %v164
    %v169 = vlaneseq
    %v170 = vshrl.u32 %v169, 7
    %v171 = vsub.s32 1, %v170
    %v172 = vrot.slane %v33, %v171
    %v173 = vmul.f32 %v165, %v172
    %v174 = vmul.f32 %v166, %v172
    %v175 = vmul.f32 %v167, %v172
    %v176 = vmul.f32 %v168, %v172
    %v177 = vlaneseq
    %v178 = vshrl.u32 %v177, 7
    %v179 = vsub.s32 2, %v178
    %v180 = vrot.slane %v33, %v179
    %v181 = vadd.f32 %v173, %v180
    %v182 = vadd.f32 %v174, %v180
    %v183 = vadd.f32 %v175, %v180
    %v184 = vadd.f32 %v176, %v180
    %v185 = vpack.c.bf16 %v182, %v181
    %v186 = vpack.c.bf16 %v184, %v183
    %v187 = vld [vmem:[%s2] sm:$0xff]
    %v188 = vld [vmem:[%s2 + $0x8] sm:$0xff]
    %v189 = vld [vmem:[%s2 + $0x10] sm:$0xff]
    %v190 = vld [vmem:[%s2 + $0x18] sm:$0xff]
    %v191 = vld [vmem:[%s2 + $0x20] sm:$0xff]
    %v192 = vld [vmem:[%s2 + $0x28] sm:$0xff]
    %v193 = vld [vmem:[%s2 + $0x30] sm:$0xff]
    %v194 = vld [vmem:[%s2 + $0x38] sm:$0xff]
    %v195 = vld [vmem:[%s2 + $0x40] sm:$0xff]
    %v196 = vld [vmem:[%s2 + $0x48] sm:$0xff]
    %v197 = vld [vmem:[%s2 + $0x50] sm:$0xff]
    %v198 = vld [vmem:[%s2 + $0x58] sm:$0xff]
    %v199 = vld [vmem:[%s2 + $0x60] sm:$0xff]
    %v200 = vld [vmem:[%s2 + $0x68] sm:$0xff]
    %v201 = vld [vmem:[%s2 + $0x70] sm:$0xff]
    %v202 = vld [vmem:[%s2 + $0x78] sm:$0xff]
    %v203 = vld [vmem:[%s2 + $0x80] sm:$0xff]
    %v204 = vld [vmem:[%s2 + $0x88] sm:$0xff]
    %v205 = vld [vmem:[%s2 + $0x90] sm:$0xff]
    %v206 = vld [vmem:[%s2 + $0x98] sm:$0xff]
    %v207 = vld [vmem:[%s2 + $0xa0] sm:$0xff]
    %v208 = vld [vmem:[%s2 + $0xa8] sm:$0xff]
    %v209 = vld [vmem:[%s2 + $0xb0] sm:$0xff]
    %v210 = vld [vmem:[%s2 + $0xb8] sm:$0xff]
    %v211 = vld [vmem:[%s2 + $0xc0] sm:$0xff]
    %v212 = vld [vmem:[%s2 + $0xc8] sm:$0xff]
    %v213 = vld [vmem:[%s2 + $0xd0] sm:$0xff]
    %v214 = vld [vmem:[%s2 + $0xd8] sm:$0xff]
    %v215 = vld [vmem:[%s2 + $0xe0] sm:$0xff]
    %v216 = vld [vmem:[%s2 + $0xe8] sm:$0xff]
    %v217 = vld [vmem:[%s2 + $0xf0] sm:$0xff]
    %v218 = vld [vmem:[%s2 + $0xf8] sm:$0xff]
    %v219 = vld [vmem:[%s3] sm:$0xff]
    %v220 = vld [vmem:[%s3 + $0x8] sm:$0xff]
    %v223 = vlaneseq
    %v224 = vshrl.u32 %v223, 7
    %v225 = vsub.s32 0, %v224
    %v226 = vrot.slane %v219, %v225
    %v227 = vlaneseq
    %v228 = vshrl.u32 %v227, 7
    %v229 = vsub.s32 1, %v228
    %v230 = vrot.slane %v219, %v229
    %v231 = vlaneseq
    %v232 = vshrl.u32 %v231, 7
    %v233 = vsub.s32 2, %v232
    %v234 = vrot.slane %v219, %v233
    %v235 = vlaneseq
    %v236 = vshrl.u32 %v235, 7
    %v237 = vsub.s32 3, %v236
    %v238 = vrot.slane %v219, %v237
    %v239 = vlaneseq
    %v240 = vshrl.u32 %v239, 7
    %v241 = vsub.s32 4, %v240
    %v242 = vrot.slane %v219, %v241
    %v243 = vlaneseq
    %v244 = vshrl.u32 %v243, 7
    %v245 = vsub.s32 5, %v244
    %v246 = vrot.slane %v219, %v245
    %v247 = vlaneseq
    %v248 = vshrl.u32 %v247, 7
    %v249 = vsub.s32 6, %v248
    %v250 = vrot.slane %v219, %v249
    %v251 = vlaneseq
    %v252 = vshrl.u32 %v251, 7
    %v253 = vsub.s32 7, %v252
    %v254 = vrot.slane %v219, %v253
    %v255 = vlaneseq
    %v256 = vshrl.u32 %v255, 7
    %v257 = vsub.s32 0, %v256
    %v258 = vrot.slane %v220, %v257
    %v259 = vlaneseq
    %v260 = vshrl.u32 %v259, 7
    %v261 = vsub.s32 1, %v260
    %v262 = vrot.slane %v220, %v261
    %v263 = vlaneseq
    %v264 = vshrl.u32 %v263, 7
    %v265 = vsub.s32 2, %v264
    %v266 = vrot.slane %v220, %v265
    %v267 = vlaneseq
    %v268 = vshrl.u32 %v267, 7
    %v269 = vsub.s32 3, %v268
    %v270 = vrot.slane %v220, %v269
    %v271 = vlaneseq
    %v272 = vshrl.u32 %v271, 7
    %v273 = vsub.s32 4, %v272
    %v274 = vrot.slane %v220, %v273
    %v275 = vlaneseq
    %v276 = vshrl.u32 %v275, 7
    %v277 = vsub.s32 5, %v276
    %v278 = vrot.slane %v220, %v277
    %v279 = vlaneseq
    %v280 = vshrl.u32 %v279, 7
    %v281 = vsub.s32 6, %v280
    %v282 = vrot.slane %v220, %v281
    %v283 = vlaneseq
    %v284 = vshrl.u32 %v283, 7
    %v285 = vsub.s32 7, %v284
    %v286 = vrot.slane %v220, %v285
    %v335 = vunpack.c.l.b16 %v187
    %v336 = vunpack.c.h.b16 %v187
    %v337 = vunpack.c.l.b16 %v188
    %v338 = vunpack.c.h.b16 %v188
    %v339 = vunpack.c.l.b16 %v189
    %v340 = vunpack.c.h.b16 %v189
    %v341 = vunpack.c.l.b16 %v190
    %v342 = vunpack.c.h.b16 %v190
    %v343 = vunpack.c.l.b16 %v191
    %v344 = vunpack.c.h.b16 %v191
    %v345 = vunpack.c.l.b16 %v192
    %v346 = vunpack.c.h.b16 %v192
    %v347 = vunpack.c.l.b16 %v193
    %v348 = vunpack.c.h.b16 %v193
    %v349 = vunpack.c.l.b16 %v194
    %v350 = vunpack.c.h.b16 %v194
    %v351 = vunpack.c.l.b16 %v195
    %v352 = vunpack.c.h.b16 %v195
    %v353 = vunpack.c.l.b16 %v196
    %v354 = vunpack.c.h.b16 %v196
    %v355 = vunpack.c.l.b16 %v197
    %v356 = vunpack.c.h.b16 %v197
    %v357 = vunpack.c.l.b16 %v198
    %v358 = vunpack.c.h.b16 %v198
    %v359 = vunpack.c.l.b16 %v199
    %v360 = vunpack.c.h.b16 %v199
    %v361 = vunpack.c.l.b16 %v200
    %v362 = vunpack.c.h.b16 %v200
    %v363 = vunpack.c.l.b16 %v201
    %v364 = vunpack.c.h.b16 %v201
    %v365 = vunpack.c.l.b16 %v202
    %v366 = vunpack.c.h.b16 %v202
    %v367 = vunpack.c.l.b16 %v203
    %v368 = vunpack.c.h.b16 %v203
    %v369 = vunpack.c.l.b16 %v204
    %v370 = vunpack.c.h.b16 %v204
    %v371 = vunpack.c.l.b16 %v205
    %v372 = vunpack.c.h.b16 %v205
    %v373 = vunpack.c.l.b16 %v206
    %v374 = vunpack.c.h.b16 %v206
    %v375 = vunpack.c.l.b16 %v207
    %v376 = vunpack.c.h.b16 %v207
    %v377 = vunpack.c.l.b16 %v208
    %v378 = vunpack.c.h.b16 %v208
    %v379 = vunpack.c.l.b16 %v209
    %v380 = vunpack.c.h.b16 %v209
    %v381 = vunpack.c.l.b16 %v210
    %v382 = vunpack.c.h.b16 %v210
    %v383 = vunpack.c.l.b16 %v211
    %v384 = vunpack.c.h.b16 %v211
    %v385 = vunpack.c.l.b16 %v212
    %v386 = vunpack.c.h.b16 %v212
    %v387 = vunpack.c.l.b16 %v213
    %v388 = vunpack.c.h.b16 %v213
    %v389 = vunpack.c.l.b16 %v214
    %v390 = vunpack.c.h.b16 %v214
    %v391 = vunpack.c.l.b16 %v215
    %v392 = vunpack.c.h.b16 %v215
    %v393 = vunpack.c.l.b16 %v216
    %v394 = vunpack.c.h.b16 %v216
    %v395 = vunpack.c.l.b16 %v217
    %v396 = vunpack.c.h.b16 %v217
    %v397 = vunpack.c.l.b16 %v218
    %v398 = vunpack.c.h.b16 %v218
    %v399 = vpack.c.b16 %v351, %v335
    %v400 = vpack.c.b16 %v352, %v336
    %v401 = vpack.c.b16 %v353, %v337
    %v402 = vpack.c.b16 %v354, %v338
    %v403 = vpack.c.b16 %v355, %v339
    %v404 = vpack.c.b16 %v356, %v340
    %v405 = vpack.c.b16 %v357, %v341
    %v406 = vpack.c.b16 %v358, %v342
    %v407 = vpack.c.b16 %v359, %v343
    %v408 = vpack.c.b16 %v360, %v344
    %v409 = vpack.c.b16 %v361, %v345
    %v410 = vpack.c.b16 %v362, %v346
    %v411 = vpack.c.b16 %v363, %v347
    %v412 = vpack.c.b16 %v364, %v348
    %v413 = vpack.c.b16 %v365, %v349
    %v414 = vpack.c.b16 %v366, %v350
    %v415 = vpack.c.b16 %v383, %v367
    %v416 = vpack.c.b16 %v384, %v368
    %v417 = vpack.c.b16 %v385, %v369
    %v418 = vpack.c.b16 %v386, %v370
    %v419 = vpack.c.b16 %v387, %v371
    %v420 = vpack.c.b16 %v388, %v372
    %v421 = vpack.c.b16 %v389, %v373
    %v422 = vpack.c.b16 %v390, %v374
    %v423 = vpack.c.b16 %v391, %v375
    %v424 = vpack.c.b16 %v392, %v376
    %v425 = vpack.c.b16 %v393, %v377
    %v426 = vpack.c.b16 %v394, %v378
    %v427 = vpack.c.b16 %v395, %v379
    %v428 = vpack.c.b16 %v396, %v380
    %v429 = vpack.c.b16 %v397, %v381
    %v430 = vpack.c.b16 %v398, %v382
    %v464 = vsel %vm56, %v185, 0
    %v467 = vsel %vm56, %v186, 0
    %469 = vmatprep.subr.bf16.mxu0 0
    %470 = vmatpush1.bf16.msra.mxu0 0
    %471 = vmatprep.subr.bf16.mxu0 0
    %472 = vmatpush1.bf16.msra.mxu0 0
    %473 = vmatprep.subr.bf16.mxu0 0
    %474 = vmatpush1.bf16.msra.mxu0 0
    %475 = vmatprep.subr.bf16.mxu0 0
    %476 = vmatpush1.bf16.msra.mxu0 0
    %477 = vmatprep.subr.bf16.mxu0 0
    %478 = vmatpush1.bf16.msra.mxu0 0
    %479 = vmatprep.subr.bf16.mxu0 0
    %480 = vmatpush1.bf16.msra.mxu0 0
    %481 = vmatprep.subr.bf16.mxu0 %v416
    %482 = vmatpush1.bf16.msra.mxu0 %v415
    %483 = vmatprep.subr.bf16.mxu0 %v400
    %484 = vmatpush1.bf16.msra.mxu0 %v399
    %485 = vmatprep.subr.bf16.mxu0 0
    %486 = vmatpush2.bf16.msra.mxu0 0
    %487 = vmatprep.subr.bf16.mxu0 0
    %488 = vmatpush2.bf16.msra.mxu0 0
    %489 = vmatprep.subr.bf16.mxu0 0
    %490 = vmatpush2.bf16.msra.mxu0 0
    %491 = vmatprep.subr.bf16.mxu0 0
    %492 = vmatpush2.bf16.msra.mxu0 0
    %493 = vmatprep.subr.bf16.mxu0 0
    %494 = vmatpush2.bf16.msra.mxu0 0
    %495 = vmatprep.subr.bf16.mxu0 0
    %496 = vmatpush2.bf16.msra.mxu0 0
    %497 = vmatprep.subr.bf16.mxu0 0
    %498 = vmatpush2.bf16.msra.mxu0 0
    %499 = vmatprep.subr.bf16.mxu0 0
    %500 = vmatpush2.bf16.msra.mxu0 0
    %501 = vmatprep.mubr.bf16.mxu0 0
    %502 = vmatmul.mubr.bf16.gmra.mxu0 %v464
    %v503 = vpop.f32.mrf.mxu0
    %v504 = vadd.f32 %v226, %v503
    %v505 = vpop.f32.mrf.mxu0
    %v506 = vadd.f32 %v230, %v505
    %v507 = vpop.f32.mrf.mxu0
    %v508 = vadd.f32 %v226, %v507
    %v509 = vpop.f32.mrf.mxu0
    %v510 = vadd.f32 %v230, %v509
    %511 = vmatprep.mubr.bf16.mxu0 0
    %512 = vmatmul.mubr.bf16.gmra.mxu0 %v467
    %v513 = vpop.f32.mrf.mxu0
    %v514 = vadd.f32 %v226, %v513
    %v515 = vpop.f32.mrf.mxu0
    %v516 = vadd.f32 %v230, %v515
    %v517 = vpop.f32.mrf.mxu0
    %v518 = vadd.f32 %v226, %v517
    %v519 = vpop.f32.mrf.mxu0
    %v520 = vadd.f32 %v230, %v519
    %521 = vdwg.mxu0
    %522 = vmatprep.subr.bf16.mxu0 0
    %523 = vmatpush1.bf16.msra.mxu0 0
    %524 = vmatprep.subr.bf16.mxu0 0
    %525 = vmatpush1.bf16.msra.mxu0 0
    %526 = vmatprep.subr.bf16.mxu0 0
    %527 = vmatpush1.bf16.msra.mxu0 0
    %528 = vmatprep.subr.bf16.mxu0 0
    %529 = vmatpush1.bf16.msra.mxu0 0
    %530 = vmatprep.subr.bf16.mxu0 0
    %531 = vmatpush1.bf16.msra.mxu0 0
    %532 = vmatprep.subr.bf16.mxu0 0
    %533 = vmatpush1.bf16.msra.mxu0 0
    %534 = vmatprep.subr.bf16.mxu0 %v418
    %535 = vmatpush1.bf16.msra.mxu0 %v417
    %536 = vmatprep.subr.bf16.mxu0 %v402
    %537 = vmatpush1.bf16.msra.mxu0 %v401
    %538 = vmatprep.subr.bf16.mxu0 0
    %539 = vmatpush2.bf16.msra.mxu0 0
    %540 = vmatprep.subr.bf16.mxu0 0
    %541 = vmatpush2.bf16.msra.mxu0 0
    %542 = vmatprep.subr.bf16.mxu0 0
    %543 = vmatpush2.bf16.msra.mxu0 0
    %544 = vmatprep.subr.bf16.mxu0 0
    %545 = vmatpush2.bf16.msra.mxu0 0
    %546 = vmatprep.subr.bf16.mxu0 0
    %547 = vmatpush2.bf16.msra.mxu0 0
    %548 = vmatprep.subr.bf16.mxu0 0
    %549 = vmatpush2.bf16.msra.mxu0 0
    %550 = vmatprep.subr.bf16.mxu0 0
    %551 = vmatpush2.bf16.msra.mxu0 0
    %552 = vmatprep.subr.bf16.mxu0 0
    %553 = vmatpush2.bf16.msra.mxu0 0
    %554 = vmatprep.mubr.bf16.mxu0 0
    %555 = vmatmul.mubr.bf16.gmra.mxu0 %v464
    %v556 = vpop.f32.mrf.mxu0
    %v557 = vadd.f32 %v234, %v556
    %v558 = vpop.f32.mrf.mxu0
    %v559 = vadd.f32 %v238, %v558
    %v560 = vpop.f32.mrf.mxu0
    %v561 = vadd.f32 %v234, %v560
    %v562 = vpop.f32.mrf.mxu0
    %v563 = vadd.f32 %v238, %v562
    %564 = vmatprep.mubr.bf16.mxu0 0
    %565 = vmatmul.mubr.bf16.gmra.mxu0 %v467
    %v566 = vpop.f32.mrf.mxu0
    %v567 = vadd.f32 %v234, %v566
    %v568 = vpop.f32.mrf.mxu0
    %v569 = vadd.f32 %v238, %v568
    %v570 = vpop.f32.mrf.mxu0
    %v571 = vadd.f32 %v234, %v570
    %v572 = vpop.f32.mrf.mxu0
    %v573 = vadd.f32 %v238, %v572
    %574 = vdwg.mxu0
    %575 = vmatprep.subr.bf16.mxu0 0
    %576 = vmatpush1.bf16.msra.mxu0 0
    %577 = vmatprep.subr.bf16.mxu0 0
    %578 = vmatpush1.bf16.msra.mxu0 0
    %579 = vmatprep.subr.bf16.mxu0 0
    %580 = vmatpush1.bf16.msra.mxu0 0
    %581 = vmatprep.subr.bf16.mxu0 0
    %582 = vmatpush1.bf16.msra.mxu0 0
    %583 = vmatprep.subr.bf16.mxu0 0
    %584 = vmatpush1.bf16.msra.mxu0 0
    %585 = vmatprep.subr.bf16.mxu0 0
    %586 = vmatpush1.bf16.msra.mxu0 0
    %587 = vmatprep.subr.bf16.mxu0 %v420
    %588 = vmatpush1.bf16.msra.mxu0 %v419
    %589 = vmatprep.subr.bf16.mxu0 %v404
    %590 = vmatpush1.bf16.msra.mxu0 %v403
    %591 = vmatprep.subr.bf16.mxu0 0
    %592 = vmatpush2.bf16.msra.mxu0 0
    %593 = vmatprep.subr.bf16.mxu0 0
    %594 = vmatpush2.bf16.msra.mxu0 0
    %595 = vmatprep.subr.bf16.mxu0 0
    %596 = vmatpush2.bf16.msra.mxu0 0
    %597 = vmatprep.subr.bf16.mxu0 0
    %598 = vmatpush2.bf16.msra.mxu0 0
    %599 = vmatprep.subr.bf16.mxu0 0
    %600 = vmatpush2.bf16.msra.mxu0 0
    %601 = vmatprep.subr.bf16.mxu0 0
    %602 = vmatpush2.bf16.msra.mxu0 0
    %603 = vmatprep.subr.bf16.mxu0 0
    %604 = vmatpush2.bf16.msra.mxu0 0
    %605 = vmatprep.subr.bf16.mxu0 0
    %606 = vmatpush2.bf16.msra.mxu0 0
    %607 = vmatprep.mubr.bf16.mxu0 0
    %608 = vmatmul.mubr.bf16.gmra.mxu0 %v464
    %v609 = vpop.f32.mrf.mxu0
    %v610 = vadd.f32 %v242, %v609
    %v611 = vpop.f32.mrf.mxu0
    %v612 = vadd.f32 %v246, %v611
    %v613 = vpop.f32.mrf.mxu0
    %v614 = vadd.f32 %v242, %v613
    %v615 = vpop.f32.mrf.mxu0
    %v616 = vadd.f32 %v246, %v615
    %617 = vmatprep.mubr.bf16.mxu0 0
    %618 = vmatmul.mubr.bf16.gmra.mxu0 %v467
    %v619 = vpop.f32.mrf.mxu0
    %v620 = vadd.f32 %v242, %v619
    %v621 = vpop.f32.mrf.mxu0
    %v622 = vadd.f32 %v246, %v621
    %v623 = vpop.f32.mrf.mxu0
    %v624 = vadd.f32 %v242, %v623
    %v625 = vpop.f32.mrf.mxu0
    %v626 = vadd.f32 %v246, %v625
    %627 = vdwg.mxu0
    %628 = vmatprep.subr.bf16.mxu0 0
    %629 = vmatpush1.bf16.msra.mxu0 0
    %630 = vmatprep.subr.bf16.mxu0 0
    %631 = vmatpush1.bf16.msra.mxu0 0
    %632 = vmatprep.subr.bf16.mxu0 0
    %633 = vmatpush1.bf16.msra.mxu0 0
    %634 = vmatprep.subr.bf16.mxu0 0
    %635 = vmatpush1.bf16.msra.mxu0 0
    %636 = vmatprep.subr.bf16.mxu0 0
    %637 = vmatpush1.bf16.msra.mxu0 0
    %638 = vmatprep.subr.bf16.mxu0 0
    %639 = vmatpush1.bf16.msra.mxu0 0
    %640 = vmatprep.subr.bf16.mxu0 %v422
    %641 = vmatpush1.bf16.msra.mxu0 %v421
    %642 = vmatprep.subr.bf16.mxu0 %v406
    %643 = vmatpush1.bf16.msra.mxu0 %v405
    %644 = vmatprep.subr.bf16.mxu0 0
    %645 = vmatpush2.bf16.msra.mxu0 0
    %646 = vmatprep.subr.bf16.mxu0 0
    %647 = vmatpush2.bf16.msra.mxu0 0
    %648 = vmatprep.subr.bf16.mxu0 0
    %649 = vmatpush2.bf16.msra.mxu0 0
    %650 = vmatprep.subr.bf16.mxu0 0
    %651 = vmatpush2.bf16.msra.mxu0 0
    %652 = vmatprep.subr.bf16.mxu0 0
    %653 = vmatpush2.bf16.msra.mxu0 0
    %654 = vmatprep.subr.bf16.mxu0 0
    %655 = vmatpush2.bf16.msra.mxu0 0
    %656 = vmatprep.subr.bf16.mxu0 0
    %657 = vmatpush2.bf16.msra.mxu0 0
    %658 = vmatprep.subr.bf16.mxu0 0
    %659 = vmatpush2.bf16.msra.mxu0 0
    %660 = vmatprep.mubr.bf16.mxu0 0
    %661 = vmatmul.mubr.bf16.gmra.mxu0 %v464
    %v662 = vpop.f32.mrf.mxu0
    %v663 = vadd.f32 %v250, %v662
    %v664 = vpop.f32.mrf.mxu0
    %v665 = vadd.f32 %v254, %v664
    %v666 = vpop.f32.mrf.mxu0
    %v667 = vadd.f32 %v250, %v666
    %v668 = vpop.f32.mrf.mxu0
    %v669 = vadd.f32 %v254, %v668
    %670 = vmatprep.mubr.bf16.mxu0 0
    %671 = vmatmul.mubr.bf16.gmra.mxu0 %v467
    %v672 = vpop.f32.mrf.mxu0
    %v673 = vadd.f32 %v250, %v672
    %v674 = vpop.f32.mrf.mxu0
    %v675 = vadd.f32 %v254, %v674
    %v676 = vpop.f32.mrf.mxu0
    %v677 = vadd.f32 %v250, %v676
    %v678 = vpop.f32.mrf.mxu0
    %v679 = vadd.f32 %v254, %v678
    %680 = vdwg.mxu0
    %681 = vmatprep.subr.bf16.mxu0 0
    %682 = vmatpush1.bf16.msra.mxu0 0
    %683 = vmatprep.subr.bf16.mxu0 0
    %684 = vmatpush1.bf16.msra.mxu0 0
    %685 = vmatprep.subr.bf16.mxu0 0
    %686 = vmatpush1.bf16.msra.mxu0 0
    %687 = vmatprep.subr.bf16.mxu0 0
    %688 = vmatpush1.bf16.msra.mxu0 0
    %689 = vmatprep.subr.bf16.mxu0 0
    %690 = vmatpush1.bf16.msra.mxu0 0
    %691 = vmatprep.subr.bf16.mxu0 0
    %692 = vmatpush1.bf16.msra.mxu0 0
    %693 = vmatprep.subr.bf16.mxu0 %v424
    %694 = vmatpush1.bf16.msra.mxu0 %v423
    %695 = vmatprep.subr.bf16.mxu0 %v408
    %696 = vmatpush1.bf16.msra.mxu0 %v407
    %697 = vmatprep.subr.bf16.mxu0 0
    %698 = vmatpush2.bf16.msra.mxu0 0
    %699 = vmatprep.subr.bf16.mxu0 0
    %700 = vmatpush2.bf16.msra.mxu0 0
    %701 = vmatprep.subr.bf16.mxu0 0
    %702 = vmatpush2.bf16.msra.mxu0 0
    %703 = vmatprep.subr.bf16.mxu0 0
    %704 = vmatpush2.bf16.msra.mxu0 0
    %705 = vmatprep.subr.bf16.mxu0 0
    %706 = vmatpush2.bf16.msra.mxu0 0
    %707 = vmatprep.subr.bf16.mxu0 0
    %708 = vmatpush2.bf16.msra.mxu0 0
    %709 = vmatprep.subr.bf16.mxu0 0
    %710 = vmatpush2.bf16.msra.mxu0 0
    %711 = vmatprep.subr.bf16.mxu0 0
    %712 = vmatpush2.bf16.msra.mxu0 0
    %713 = vmatprep.mubr.bf16.mxu0 0
    %714 = vmatmul.mubr.bf16.gmra.mxu0 %v464
    %v715 = vpop.f32.mrf.mxu0
    %v716 = vadd.f32 %v258, %v715
    %v717 = vpop.f32.mrf.mxu0
    %v718 = vadd.f32 %v262, %v717
    %v719 = vpop.f32.mrf.mxu0
    %v720 = vadd.f32 %v258, %v719
    %v721 = vpop.f32.mrf.mxu0
    %v722 = vadd.f32 %v262, %v721
    %723 = vmatprep.mubr.bf16.mxu0 0
    %724 = vmatmul.mubr.bf16.gmra.mxu0 %v467
    %v725 = vpop.f32.mrf.mxu0
    %v726 = vadd.f32 %v258, %v725
    %v727 = vpop.f32.mrf.mxu0
    %v728 = vadd.f32 %v262, %v727
    %v729 = vpop.f32.mrf.mxu0
    %v730 = vadd.f32 %v258, %v729
    %v731 = vpop.f32.mrf.mxu0
    %v732 = vadd.f32 %v262, %v731
    %733 = vdwg.mxu0
    %734 = vmatprep.subr.bf16.mxu0 0
    %735 = vmatpush1.bf16.msra.mxu0 0
    %736 = vmatprep.subr.bf16.mxu0 0
    %737 = vmatpush1.bf16.msra.mxu0 0
    %738 = vmatprep.subr.bf16.mxu0 0
    %739 = vmatpush1.bf16.msra.mxu0 0
    %740 = vmatprep.subr.bf16.mxu0 0
    %741 = vmatpush1.bf16.msra.mxu0 0
    %742 = vmatprep.subr.bf16.mxu0 0
    %743 = vmatpush1.bf16.msra.mxu0 0
    %744 = vmatprep.subr.bf16.mxu0 0
    %745 = vmatpush1.bf16.msra.mxu0 0
    %746 = vmatprep.subr.bf16.mxu0 %v426
    %747 = vmatpush1.bf16.msra.mxu0 %v425
    %748 = vmatprep.subr.bf16.mxu0 %v410
    %749 = vmatpush1.bf16.msra.mxu0 %v409
    %750 = vmatprep.subr.bf16.mxu0 0
    %751 = vmatpush2.bf16.msra.mxu0 0
    %752 = vmatprep.subr.bf16.mxu0 0
    %753 = vmatpush2.bf16.msra.mxu0 0
    %754 = vmatprep.subr.bf16.mxu0 0
    %755 = vmatpush2.bf16.msra.mxu0 0
    %756 = vmatprep.subr.bf16.mxu0 0
    %757 = vmatpush2.bf16.msra.mxu0 0
    %758 = vmatprep.subr.bf16.mxu0 0
    %759 = vmatpush2.bf16.msra.mxu0 0
    %760 = vmatprep.subr.bf16.mxu0 0
    %761 = vmatpush2.bf16.msra.mxu0 0
    %762 = vmatprep.subr.bf16.mxu0 0
    %763 = vmatpush2.bf16.msra.mxu0 0
    %764 = vmatprep.subr.bf16.mxu0 0
    %765 = vmatpush2.bf16.msra.mxu0 0
    %766 = vmatprep.mubr.bf16.mxu0 0
    %767 = vmatmul.mubr.bf16.gmra.mxu0 %v464
    %v768 = vpop.f32.mrf.mxu0
    %v769 = vadd.f32 %v266, %v768
    %v770 = vpop.f32.mrf.mxu0
    %v771 = vadd.f32 %v270, %v770
    %v772 = vpop.f32.mrf.mxu0
    %v773 = vadd.f32 %v266, %v772
    %v774 = vpop.f32.mrf.mxu0
    %v775 = vadd.f32 %v270, %v774
    %776 = vmatprep.mubr.bf16.mxu0 0
    %777 = vmatmul.mubr.bf16.gmra.mxu0 %v467
    %v778 = vpop.f32.mrf.mxu0
    %v779 = vadd.f32 %v266, %v778
    %v780 = vpop.f32.mrf.mxu0
    %v781 = vadd.f32 %v270, %v780
    %v782 = vpop.f32.mrf.mxu0
    %v783 = vadd.f32 %v266, %v782
    %v784 = vpop.f32.mrf.mxu0
    %v785 = vadd.f32 %v270, %v784
    %786 = vdwg.mxu0
    %787 = vmatprep.subr.bf16.mxu0 0
    %788 = vmatpush1.bf16.msra.mxu0 0
    %789 = vmatprep.subr.bf16.mxu0 0
    %790 = vmatpush1.bf16.msra.mxu0 0
    %791 = vmatprep.subr.bf16.mxu0 0
    %792 = vmatpush1.bf16.msra.mxu0 0
    %793 = vmatprep.subr.bf16.mxu0 0
    %794 = vmatpush1.bf16.msra.mxu0 0
    %795 = vmatprep.subr.bf16.mxu0 0
    %796 = vmatpush1.bf16.msra.mxu0 0
    %797 = vmatprep.subr.bf16.mxu0 0
    %798 = vmatpush1.bf16.msra.mxu0 0
    %799 = vmatprep.subr.bf16.mxu0 %v428
    %800 = vmatpush1.bf16.msra.mxu0 %v427
    %801 = vmatprep.subr.bf16.mxu0 %v412
    %802 = vmatpush1.bf16.msra.mxu0 %v411
    %803 = vmatprep.subr.bf16.mxu0 0
    %804 = vmatpush2.bf16.msra.mxu0 0
    %805 = vmatprep.subr.bf16.mxu0 0
    %806 = vmatpush2.bf16.msra.mxu0 0
    %807 = vmatprep.subr.bf16.mxu0 0
    %808 = vmatpush2.bf16.msra.mxu0 0
    %809 = vmatprep.subr.bf16.mxu0 0
    %810 = vmatpush2.bf16.msra.mxu0 0
    %811 = vmatprep.subr.bf16.mxu0 0
    %812 = vmatpush2.bf16.msra.mxu0 0
    %813 = vmatprep.subr.bf16.mxu0 0
    %814 = vmatpush2.bf16.msra.mxu0 0
    %815 = vmatprep.subr.bf16.mxu0 0
    %816 = vmatpush2.bf16.msra.mxu0 0
    %817 = vmatprep.subr.bf16.mxu0 0
    %818 = vmatpush2.bf16.msra.mxu0 0
    %819 = vmatprep.mubr.bf16.mxu0 0
    %820 = vmatmul.mubr.bf16.gmra.mxu0 %v464
    %v821 = vpop.f32.mrf.mxu0
    %v822 = vadd.f32 %v274, %v821
    %v823 = vpop.f32.mrf.mxu0
    %v824 = vadd.f32 %v278, %v823
    %v825 = vpop.f32.mrf.mxu0
    %v826 = vadd.f32 %v274, %v825
    %v827 = vpop.f32.mrf.mxu0
    %v828 = vadd.f32 %v278, %v827
    %829 = vmatprep.mubr.bf16.mxu0 0
    %830 = vmatmul.mubr.bf16.gmra.mxu0 %v467
    %v831 = vpop.f32.mrf.mxu0
    %v832 = vadd.f32 %v274, %v831
    %v833 = vpop.f32.mrf.mxu0
    %v834 = vadd.f32 %v278, %v833
    %v835 = vpop.f32.mrf.mxu0
    %v836 = vadd.f32 %v274, %v835
    %v837 = vpop.f32.mrf.mxu0
    %v838 = vadd.f32 %v278, %v837
    %839 = vdwg.mxu0
    %840 = vmatprep.subr.bf16.mxu0 0
    %841 = vmatpush1.bf16.msra.mxu0 0
    %842 = vmatprep.subr.bf16.mxu0 0
    %843 = vmatpush1.bf16.msra.mxu0 0
    %844 = vmatprep.subr.bf16.mxu0 0
    %845 = vmatpush1.bf16.msra.mxu0 0
    %846 = vmatprep.subr.bf16.mxu0 0
    %847 = vmatpush1.bf16.msra.mxu0 0
    %848 = vmatprep.subr.bf16.mxu0 0
    %849 = vmatpush1.bf16.msra.mxu0 0
    %850 = vmatprep.subr.bf16.mxu0 0
    %851 = vmatpush1.bf16.msra.mxu0 0
    %852 = vmatprep.subr.bf16.mxu0 %v430
    %853 = vmatpush1.bf16.msra.mxu0 %v429
    %854 = vmatprep.subr.bf16.mxu0 %v414
    %855 = vmatpush1.bf16.msra.mxu0 %v413
    %856 = vmatprep.subr.bf16.mxu0 0
    %857 = vmatpush2.bf16.msra.mxu0 0
    %858 = vmatprep.subr.bf16.mxu0 0
    %859 = vmatpush2.bf16.msra.mxu0 0
    %860 = vmatprep.subr.bf16.mxu0 0
    %861 = vmatpush2.bf16.msra.mxu0 0
    %862 = vmatprep.subr.bf16.mxu0 0
    %863 = vmatpush2.bf16.msra.mxu0 0
    %864 = vmatprep.subr.bf16.mxu0 0
    %865 = vmatpush2.bf16.msra.mxu0 0
    %866 = vmatprep.subr.bf16.mxu0 0
    %867 = vmatpush2.bf16.msra.mxu0 0
    %868 = vmatprep.subr.bf16.mxu0 0
    %869 = vmatpush2.bf16.msra.mxu0 0
    %870 = vmatprep.subr.bf16.mxu0 0
    %871 = vmatpush2.bf16.msra.mxu0 0
    %872 = vmatprep.mubr.bf16.mxu0 0
    %873 = vmatmul.mubr.bf16.gmra.mxu0 %v464
    %v874 = vpop.f32.mrf.mxu0
    %v875 = vadd.f32 %v282, %v874
    %v876 = vpop.f32.mrf.mxu0
    %v877 = vadd.f32 %v286, %v876
    %v878 = vpop.f32.mrf.mxu0
    %v879 = vadd.f32 %v282, %v878
    %v880 = vpop.f32.mrf.mxu0
    %v881 = vadd.f32 %v286, %v880
    %882 = vmatprep.mubr.bf16.mxu0 0
    %883 = vmatmul.mubr.bf16.gmra.mxu0 %v467
    %v884 = vpop.f32.mrf.mxu0
    %v885 = vadd.f32 %v282, %v884
    %v886 = vpop.f32.mrf.mxu0
    %v887 = vadd.f32 %v286, %v886
    %v888 = vpop.f32.mrf.mxu0
    %v889 = vadd.f32 %v282, %v888
    %v890 = vpop.f32.mrf.mxu0
    %v891 = vadd.f32 %v286, %v890
    %892 = vdwg.mxu0
    %v893 = vmax.f32 %v504, 0.0
    %v894 = vmax.f32 %v506, 0.0
    %v895 = vmax.f32 %v557, 0.0
    %v896 = vmax.f32 %v559, 0.0
    %v897 = vmax.f32 %v610, 0.0
    %v898 = vmax.f32 %v612, 0.0
    %v899 = vmax.f32 %v663, 0.0
    %v900 = vmax.f32 %v665, 0.0
    %v901 = vmax.f32 %v716, 0.0
    %v902 = vmax.f32 %v718, 0.0
    %v903 = vmax.f32 %v769, 0.0
    %v904 = vmax.f32 %v771, 0.0
    %v905 = vmax.f32 %v822, 0.0
    %v906 = vmax.f32 %v824, 0.0
    %v907 = vmax.f32 %v875, 0.0
    %v908 = vmax.f32 %v877, 0.0
    %v909 = vmax.f32 %v508, 0.0
    %v910 = vmax.f32 %v510, 0.0
    %v911 = vmax.f32 %v561, 0.0
    %v912 = vmax.f32 %v563, 0.0
    %v913 = vmax.f32 %v614, 0.0
    %v914 = vmax.f32 %v616, 0.0
    %v915 = vmax.f32 %v667, 0.0
    %v916 = vmax.f32 %v669, 0.0
    %v917 = vmax.f32 %v720, 0.0
    %v918 = vmax.f32 %v722, 0.0
    %v919 = vmax.f32 %v773, 0.0
    %v920 = vmax.f32 %v775, 0.0
    %v921 = vmax.f32 %v826, 0.0
    %v922 = vmax.f32 %v828, 0.0
    %v923 = vmax.f32 %v879, 0.0
    %v924 = vmax.f32 %v881, 0.0
    %v925 = vmax.f32 %v514, 0.0
    %v926 = vmax.f32 %v516, 0.0
    %v927 = vmax.f32 %v567, 0.0
    %v928 = vmax.f32 %v569, 0.0
    %v929 = vmax.f32 %v620, 0.0
    %v930 = vmax.f32 %v622, 0.0
    %v931 = vmax.f32 %v673, 0.0
    %v932 = vmax.f32 %v675, 0.0
    %v933 = vmax.f32 %v726, 0.0
    %v934 = vmax.f32 %v728, 0.0
    %v935 = vmax.f32 %v779, 0.0
    %v936 = vmax.f32 %v781, 0.0
    %v937 = vmax.f32 %v832, 0.0
    %v938 = vmax.f32 %v834, 0.0
    %v939 = vmax.f32 %v885, 0.0
    %v940 = vmax.f32 %v887, 0.0
    %v941 = vmax.f32 %v518, 0.0
    %v942 = vmax.f32 %v520, 0.0
    %v943 = vmax.f32 %v571, 0.0
    %v944 = vmax.f32 %v573, 0.0
    %v945 = vmax.f32 %v624, 0.0
    %v946 = vmax.f32 %v626, 0.0
    %v947 = vmax.f32 %v677, 0.0
    %v948 = vmax.f32 %v679, 0.0
    %v949 = vmax.f32 %v730, 0.0
    %v950 = vmax.f32 %v732, 0.0
    %v951 = vmax.f32 %v783, 0.0
    %v952 = vmax.f32 %v785, 0.0
    %v953 = vmax.f32 %v836, 0.0
    %v954 = vmax.f32 %v838, 0.0
    %v955 = vmax.f32 %v889, 0.0
    %v956 = vmax.f32 %v891, 0.0
    %v957 = vpack.c.bf16 %v909, %v893
    %v958 = vpack.c.bf16 %v910, %v894
    %v959 = vpack.c.bf16 %v911, %v895
    %v960 = vpack.c.bf16 %v912, %v896
    %v961 = vpack.c.bf16 %v913, %v897
    %v962 = vpack.c.bf16 %v914, %v898
    %v963 = vpack.c.bf16 %v915, %v899
    %v964 = vpack.c.bf16 %v916, %v900
    %v965 = vpack.c.bf16 %v917, %v901
    %v966 = vpack.c.bf16 %v918, %v902
    %v967 = vpack.c.bf16 %v919, %v903
    %v968 = vpack.c.bf16 %v920, %v904
    %v969 = vpack.c.bf16 %v921, %v905
    %v970 = vpack.c.bf16 %v922, %v906
    %v971 = vpack.c.bf16 %v923, %v907
    %v972 = vpack.c.bf16 %v924, %v908
    %v973 = vpack.c.bf16 %v941, %v925
    %v974 = vpack.c.bf16 %v942, %v926
    %v975 = vpack.c.bf16 %v943, %v927
    %v976 = vpack.c.bf16 %v944, %v928
    %v977 = vpack.c.bf16 %v945, %v929
    %v978 = vpack.c.bf16 %v946, %v930
    %v979 = vpack.c.bf16 %v947, %v931
    %v980 = vpack.c.bf16 %v948, %v932
    %v981 = vpack.c.bf16 %v949, %v933
    %v982 = vpack.c.bf16 %v950, %v934
    %v983 = vpack.c.bf16 %v951, %v935
    %v984 = vpack.c.bf16 %v952, %v936
    %v985 = vpack.c.bf16 %v953, %v937
    %v986 = vpack.c.bf16 %v954, %v938
    %v987 = vpack.c.bf16 %v955, %v939
    %v988 = vpack.c.bf16 %v956, %v940
    %v989 = vld [vmem:[%s4] sm:$0xf]
    %v990 = vld [vmem:[%s4 + $0x4] sm:$0xf]
    %v991 = vld [vmem:[%s4 + $0x8] sm:$0xf]
    %v992 = vld [vmem:[%s4 + $0xc] sm:$0xf]
    %v993 = vld [vmem:[%s4 + $0x10] sm:$0xf]
    %v994 = vld [vmem:[%s4 + $0x14] sm:$0xf]
    %v995 = vld [vmem:[%s4 + $0x18] sm:$0xf]
    %v996 = vld [vmem:[%s4 + $0x1c] sm:$0xf]
    %v997 = vld [vmem:[%s4 + $0x20] sm:$0xf]
    %v998 = vld [vmem:[%s4 + $0x24] sm:$0xf]
    %v999 = vld [vmem:[%s4 + $0x28] sm:$0xf]
    %v1000 = vld [vmem:[%s4 + $0x2c] sm:$0xf]
    %v1001 = vld [vmem:[%s4 + $0x30] sm:$0xf]
    %v1002 = vld [vmem:[%s4 + $0x34] sm:$0xf]
    %v1003 = vld [vmem:[%s4 + $0x38] sm:$0xf]
    %v1004 = vld [vmem:[%s4 + $0x3c] sm:$0xf]
    %v1005 = vld [vmem:[%s4 + $0x40] sm:$0xf]
    %v1006 = vld [vmem:[%s4 + $0x44] sm:$0xf]
    %v1007 = vld [vmem:[%s4 + $0x48] sm:$0xf]
    %v1008 = vld [vmem:[%s4 + $0x4c] sm:$0xf]
    %v1009 = vld [vmem:[%s4 + $0x50] sm:$0xf]
    %v1010 = vld [vmem:[%s4 + $0x54] sm:$0xf]
    %v1011 = vld [vmem:[%s4 + $0x58] sm:$0xf]
    %v1012 = vld [vmem:[%s4 + $0x5c] sm:$0xf]
    %v1013 = vld [vmem:[%s4 + $0x60] sm:$0xf]
    %v1014 = vld [vmem:[%s4 + $0x64] sm:$0xf]
    %v1015 = vld [vmem:[%s4 + $0x68] sm:$0xf]
    %v1016 = vld [vmem:[%s4 + $0x6c] sm:$0xf]
    %v1017 = vld [vmem:[%s4 + $0x70] sm:$0xf]
    %v1018 = vld [vmem:[%s4 + $0x74] sm:$0xf]
    %v1019 = vld [vmem:[%s4 + $0x78] sm:$0xf]
    %v1020 = vld [vmem:[%s4 + $0x7c] sm:$0xf]
    %v1021 = vld [vmem:[%s4 + $0x80] sm:$0xf]
    %v1022 = vld [vmem:[%s4 + $0x84] sm:$0xf]
    %v1023 = vld [vmem:[%s4 + $0x88] sm:$0xf]
    %v1024 = vld [vmem:[%s4 + $0x8c] sm:$0xf]
    %v1025 = vld [vmem:[%s4 + $0x90] sm:$0xf]
    %v1026 = vld [vmem:[%s4 + $0x94] sm:$0xf]
    %v1027 = vld [vmem:[%s4 + $0x98] sm:$0xf]
    %v1028 = vld [vmem:[%s4 + $0x9c] sm:$0xf]
    %v1029 = vld [vmem:[%s4 + $0xa0] sm:$0xf]
    %v1030 = vld [vmem:[%s4 + $0xa4] sm:$0xf]
    %v1031 = vld [vmem:[%s4 + $0xa8] sm:$0xf]
    %v1032 = vld [vmem:[%s4 + $0xac] sm:$0xf]
    %v1033 = vld [vmem:[%s4 + $0xb0] sm:$0xf]
    %v1034 = vld [vmem:[%s4 + $0xb4] sm:$0xf]
    %v1035 = vld [vmem:[%s4 + $0xb8] sm:$0xf]
    %v1036 = vld [vmem:[%s4 + $0xbc] sm:$0xf]
    %v1037 = vld [vmem:[%s4 + $0xc0] sm:$0xf]
    %v1038 = vld [vmem:[%s4 + $0xc4] sm:$0xf]
    %v1039 = vld [vmem:[%s4 + $0xc8] sm:$0xf]
    %v1040 = vld [vmem:[%s4 + $0xcc] sm:$0xf]
    %v1041 = vld [vmem:[%s4 + $0xd0] sm:$0xf]
    %v1042 = vld [vmem:[%s4 + $0xd4] sm:$0xf]
    %v1043 = vld [vmem:[%s4 + $0xd8] sm:$0xf]
    %v1044 = vld [vmem:[%s4 + $0xdc] sm:$0xf]
    %v1045 = vld [vmem:[%s4 + $0xe0] sm:$0xf]
    %v1046 = vld [vmem:[%s4 + $0xe4] sm:$0xf]
    %v1047 = vld [vmem:[%s4 + $0xe8] sm:$0xf]
    %v1048 = vld [vmem:[%s4 + $0xec] sm:$0xf]
    %v1049 = vld [vmem:[%s4 + $0xf0] sm:$0xf]
    %v1050 = vld [vmem:[%s4 + $0xf4] sm:$0xf]
    %v1051 = vld [vmem:[%s4 + $0xf8] sm:$0xf]
    %v1052 = vld [vmem:[%s4 + $0xfc] sm:$0xf]
    %v1053 = vld [vmem:[%s4 + $0x100] sm:$0xf]
    %v1054 = vld [vmem:[%s4 + $0x104] sm:$0xf]
    %v1055 = vld [vmem:[%s4 + $0x108] sm:$0xf]
    %v1056 = vld [vmem:[%s4 + $0x10c] sm:$0xf]
    %v1057 = vld [vmem:[%s4 + $0x110] sm:$0xf]
    %v1058 = vld [vmem:[%s4 + $0x114] sm:$0xf]
    %v1059 = vld [vmem:[%s4 + $0x118] sm:$0xf]
    %v1060 = vld [vmem:[%s4 + $0x11c] sm:$0xf]
    %v1061 = vld [vmem:[%s4 + $0x120] sm:$0xf]
    %v1062 = vld [vmem:[%s4 + $0x124] sm:$0xf]
    %v1063 = vld [vmem:[%s4 + $0x128] sm:$0xf]
    %v1064 = vld [vmem:[%s4 + $0x12c] sm:$0xf]
    %v1065 = vld [vmem:[%s4 + $0x130] sm:$0xf]
    %v1066 = vld [vmem:[%s4 + $0x134] sm:$0xf]
    %v1067 = vld [vmem:[%s4 + $0x138] sm:$0xf]
    %v1068 = vld [vmem:[%s4 + $0x13c] sm:$0xf]
    %v1069 = vld [vmem:[%s4 + $0x140] sm:$0xf]
    %v1070 = vld [vmem:[%s4 + $0x144] sm:$0xf]
    %v1071 = vld [vmem:[%s4 + $0x148] sm:$0xf]
    %v1072 = vld [vmem:[%s4 + $0x14c] sm:$0xf]
    %v1073 = vld [vmem:[%s4 + $0x150] sm:$0xf]
    %v1074 = vld [vmem:[%s4 + $0x154] sm:$0xf]
    %v1075 = vld [vmem:[%s4 + $0x158] sm:$0xf]
    %v1076 = vld [vmem:[%s4 + $0x15c] sm:$0xf]
    %v1077 = vld [vmem:[%s4 + $0x160] sm:$0xf]
    %v1078 = vld [vmem:[%s4 + $0x164] sm:$0xf]
    %v1079 = vld [vmem:[%s4 + $0x168] sm:$0xf]
    %v1080 = vld [vmem:[%s4 + $0x16c] sm:$0xf]
    %v1081 = vld [vmem:[%s4 + $0x170] sm:$0xf]
    %v1082 = vld [vmem:[%s4 + $0x174] sm:$0xf]
    %v1083 = vld [vmem:[%s4 + $0x178] sm:$0xf]
    %v1084 = vld [vmem:[%s4 + $0x17c] sm:$0xf]
    %v1085 = vld [vmem:[%s4 + $0x180] sm:$0xf]
    %v1086 = vld [vmem:[%s4 + $0x184] sm:$0xf]
    %v1087 = vld [vmem:[%s4 + $0x188] sm:$0xf]
    %v1088 = vld [vmem:[%s4 + $0x18c] sm:$0xf]
    %v1089 = vld [vmem:[%s4 + $0x190] sm:$0xf]
    %v1090 = vld [vmem:[%s4 + $0x194] sm:$0xf]
    %v1091 = vld [vmem:[%s4 + $0x198] sm:$0xf]
    %v1092 = vld [vmem:[%s4 + $0x19c] sm:$0xf]
    %v1093 = vld [vmem:[%s4 + $0x1a0] sm:$0xf]
    %v1094 = vld [vmem:[%s4 + $0x1a4] sm:$0xf]
    %v1095 = vld [vmem:[%s4 + $0x1a8] sm:$0xf]
    %v1096 = vld [vmem:[%s4 + $0x1ac] sm:$0xf]
    %v1097 = vld [vmem:[%s4 + $0x1b0] sm:$0xf]
    %v1098 = vld [vmem:[%s4 + $0x1b4] sm:$0xf]
    %v1099 = vld [vmem:[%s4 + $0x1b8] sm:$0xf]
    %v1100 = vld [vmem:[%s4 + $0x1bc] sm:$0xf]
    %v1101 = vld [vmem:[%s4 + $0x1c0] sm:$0xf]
    %v1102 = vld [vmem:[%s4 + $0x1c4] sm:$0xf]
    %v1103 = vld [vmem:[%s4 + $0x1c8] sm:$0xf]
    %v1104 = vld [vmem:[%s4 + $0x1cc] sm:$0xf]
    %v1105 = vld [vmem:[%s4 + $0x1d0] sm:$0xf]
    %v1106 = vld [vmem:[%s4 + $0x1d4] sm:$0xf]
    %v1107 = vld [vmem:[%s4 + $0x1d8] sm:$0xf]
    %v1108 = vld [vmem:[%s4 + $0x1dc] sm:$0xf]
    %v1109 = vld [vmem:[%s4 + $0x1e0] sm:$0xf]
    %v1110 = vld [vmem:[%s4 + $0x1e4] sm:$0xf]
    %v1111 = vld [vmem:[%s4 + $0x1e8] sm:$0xf]
    %v1112 = vld [vmem:[%s4 + $0x1ec] sm:$0xf]
    %v1113 = vld [vmem:[%s4 + $0x1f0] sm:$0xf]
    %v1114 = vld [vmem:[%s4 + $0x1f4] sm:$0xf]
    %v1115 = vld [vmem:[%s4 + $0x1f8] sm:$0xf]
    %v1116 = vld [vmem:[%s4 + $0x1fc] sm:$0xf]
    %v1117 = vld [vmem:[%s4 + $0x200] sm:$0xf]
    %v1118 = vld [vmem:[%s4 + $0x204] sm:$0xf]
    %v1119 = vld [vmem:[%s4 + $0x208] sm:$0xf]
    %v1120 = vld [vmem:[%s4 + $0x20c] sm:$0xf]
    %v1121 = vld [vmem:[%s4 + $0x210] sm:$0xf]
    %v1122 = vld [vmem:[%s4 + $0x214] sm:$0xf]
    %v1123 = vld [vmem:[%s4 + $0x218] sm:$0xf]
    %v1124 = vld [vmem:[%s4 + $0x21c] sm:$0xf]
    %v1125 = vld [vmem:[%s4 + $0x220] sm:$0xf]
    %v1126 = vld [vmem:[%s4 + $0x224] sm:$0xf]
    %v1127 = vld [vmem:[%s4 + $0x228] sm:$0xf]
    %v1128 = vld [vmem:[%s4 + $0x22c] sm:$0xf]
    %v1129 = vld [vmem:[%s4 + $0x230] sm:$0xf]
    %v1130 = vld [vmem:[%s4 + $0x234] sm:$0xf]
    %v1131 = vld [vmem:[%s4 + $0x238] sm:$0xf]
    %v1132 = vld [vmem:[%s4 + $0x23c] sm:$0xf]
    %v1133 = vld [vmem:[%s4 + $0x240] sm:$0xf]
    %v1134 = vld [vmem:[%s4 + $0x244] sm:$0xf]
    %v1135 = vld [vmem:[%s4 + $0x248] sm:$0xf]
    %v1136 = vld [vmem:[%s4 + $0x24c] sm:$0xf]
    %v1137 = vld [vmem:[%s4 + $0x250] sm:$0xf]
    %v1138 = vld [vmem:[%s4 + $0x254] sm:$0xf]
    %v1139 = vld [vmem:[%s4 + $0x258] sm:$0xf]
    %v1140 = vld [vmem:[%s4 + $0x25c] sm:$0xf]
    %v1141 = vld [vmem:[%s4 + $0x260] sm:$0xf]
    %v1142 = vld [vmem:[%s4 + $0x264] sm:$0xf]
    %v1143 = vld [vmem:[%s4 + $0x268] sm:$0xf]
    %v1144 = vld [vmem:[%s4 + $0x26c] sm:$0xf]
    %v1145 = vld [vmem:[%s4 + $0x270] sm:$0xf]
    %v1146 = vld [vmem:[%s4 + $0x274] sm:$0xf]
    %v1147 = vld [vmem:[%s4 + $0x278] sm:$0xf]
    %v1148 = vld [vmem:[%s4 + $0x27c] sm:$0xf]
    %v1149 = vld [vmem:[%s4 + $0x280] sm:$0xf]
    %v1150 = vld [vmem:[%s4 + $0x284] sm:$0xf]
    %v1151 = vld [vmem:[%s4 + $0x288] sm:$0xf]
    %v1152 = vld [vmem:[%s4 + $0x28c] sm:$0xf]
    %v1153 = vld [vmem:[%s4 + $0x290] sm:$0xf]
    %v1154 = vld [vmem:[%s4 + $0x294] sm:$0xf]
    %v1155 = vld [vmem:[%s4 + $0x298] sm:$0xf]
    %v1156 = vld [vmem:[%s4 + $0x29c] sm:$0xf]
    %v1157 = vld [vmem:[%s4 + $0x2a0] sm:$0xf]
    %v1158 = vld [vmem:[%s4 + $0x2a4] sm:$0xf]
    %v1159 = vld [vmem:[%s4 + $0x2a8] sm:$0xf]
    %v1160 = vld [vmem:[%s4 + $0x2ac] sm:$0xf]
    %v1161 = vld [vmem:[%s4 + $0x2b0] sm:$0xf]
    %v1162 = vld [vmem:[%s4 + $0x2b4] sm:$0xf]
    %v1163 = vld [vmem:[%s4 + $0x2b8] sm:$0xf]
    %v1164 = vld [vmem:[%s4 + $0x2bc] sm:$0xf]
    %v1165 = vld [vmem:[%s4 + $0x2c0] sm:$0xf]
    %v1166 = vld [vmem:[%s4 + $0x2c4] sm:$0xf]
    %v1167 = vld [vmem:[%s4 + $0x2c8] sm:$0xf]
    %v1168 = vld [vmem:[%s4 + $0x2cc] sm:$0xf]
    %v1169 = vld [vmem:[%s4 + $0x2d0] sm:$0xf]
    %v1170 = vld [vmem:[%s4 + $0x2d4] sm:$0xf]
    %v1171 = vld [vmem:[%s4 + $0x2d8] sm:$0xf]
    %v1172 = vld [vmem:[%s4 + $0x2dc] sm:$0xf]
    %v1173 = vld [vmem:[%s4 + $0x2e0] sm:$0xf]
    %v1174 = vld [vmem:[%s4 + $0x2e4] sm:$0xf]
    %v1175 = vld [vmem:[%s4 + $0x2e8] sm:$0xf]
    %v1176 = vld [vmem:[%s4 + $0x2ec] sm:$0xf]
    %v1177 = vld [vmem:[%s4 + $0x2f0] sm:$0xf]
    %v1178 = vld [vmem:[%s4 + $0x2f4] sm:$0xf]
    %v1179 = vld [vmem:[%s4 + $0x2f8] sm:$0xf]
    %v1180 = vld [vmem:[%s4 + $0x2fc] sm:$0xf]
    %v1181 = vld [vmem:[%s4 + $0x300] sm:$0xf]
    %v1182 = vld [vmem:[%s4 + $0x304] sm:$0xf]
    %v1183 = vld [vmem:[%s4 + $0x308] sm:$0xf]
    %v1184 = vld [vmem:[%s4 + $0x30c] sm:$0xf]
    %v1185 = vld [vmem:[%s4 + $0x310] sm:$0xf]
    %v1186 = vld [vmem:[%s4 + $0x314] sm:$0xf]
    %v1187 = vld [vmem:[%s4 + $0x318] sm:$0xf]
    %v1188 = vld [vmem:[%s4 + $0x31c] sm:$0xf]
    %v1189 = vld [vmem:[%s4 + $0x320] sm:$0xf]
    %v1190 = vld [vmem:[%s4 + $0x324] sm:$0xf]
    %v1191 = vld [vmem:[%s4 + $0x328] sm:$0xf]
    %v1192 = vld [vmem:[%s4 + $0x32c] sm:$0xf]
    %v1193 = vld [vmem:[%s4 + $0x330] sm:$0xf]
    %v1194 = vld [vmem:[%s4 + $0x334] sm:$0xf]
    %v1195 = vld [vmem:[%s4 + $0x338] sm:$0xf]
    %v1196 = vld [vmem:[%s4 + $0x33c] sm:$0xf]
    %v1197 = vld [vmem:[%s4 + $0x340] sm:$0xf]
    %v1198 = vld [vmem:[%s4 + $0x344] sm:$0xf]
    %v1199 = vld [vmem:[%s4 + $0x348] sm:$0xf]
    %v1200 = vld [vmem:[%s4 + $0x34c] sm:$0xf]
    %v1201 = vld [vmem:[%s4 + $0x350] sm:$0xf]
    %v1202 = vld [vmem:[%s4 + $0x354] sm:$0xf]
    %v1203 = vld [vmem:[%s4 + $0x358] sm:$0xf]
    %v1204 = vld [vmem:[%s4 + $0x35c] sm:$0xf]
    %v1205 = vld [vmem:[%s4 + $0x360] sm:$0xf]
    %v1206 = vld [vmem:[%s4 + $0x364] sm:$0xf]
    %v1207 = vld [vmem:[%s4 + $0x368] sm:$0xf]
    %v1208 = vld [vmem:[%s4 + $0x36c] sm:$0xf]
    %v1209 = vld [vmem:[%s4 + $0x370] sm:$0xf]
    %v1210 = vld [vmem:[%s4 + $0x374] sm:$0xf]
    %v1211 = vld [vmem:[%s4 + $0x378] sm:$0xf]
    %v1212 = vld [vmem:[%s4 + $0x37c] sm:$0xf]
    %v1213 = vld [vmem:[%s4 + $0x380] sm:$0xf]
    %v1214 = vld [vmem:[%s4 + $0x384] sm:$0xf]
    %v1215 = vld [vmem:[%s4 + $0x388] sm:$0xf]
    %v1216 = vld [vmem:[%s4 + $0x38c] sm:$0xf]
    %v1217 = vld [vmem:[%s4 + $0x390] sm:$0xf]
    %v1218 = vld [vmem:[%s4 + $0x394] sm:$0xf]
    %v1219 = vld [vmem:[%s4 + $0x398] sm:$0xf]
    %v1220 = vld [vmem:[%s4 + $0x39c] sm:$0xf]
    %v1221 = vld [vmem:[%s4 + $0x3a0] sm:$0xf]
    %v1222 = vld [vmem:[%s4 + $0x3a4] sm:$0xf]
    %v1223 = vld [vmem:[%s4 + $0x3a8] sm:$0xf]
    %v1224 = vld [vmem:[%s4 + $0x3ac] sm:$0xf]
    %v1225 = vld [vmem:[%s4 + $0x3b0] sm:$0xf]
    %v1226 = vld [vmem:[%s4 + $0x3b4] sm:$0xf]
    %v1227 = vld [vmem:[%s4 + $0x3b8] sm:$0xf]
    %v1228 = vld [vmem:[%s4 + $0x3bc] sm:$0xf]
    %v1229 = vld [vmem:[%s4 + $0x3c0] sm:$0xf]
    %v1230 = vld [vmem:[%s4 + $0x3c4] sm:$0xf]
    %v1231 = vld [vmem:[%s4 + $0x3c8] sm:$0xf]
    %v1232 = vld [vmem:[%s4 + $0x3cc] sm:$0xf]
    %v1233 = vld [vmem:[%s4 + $0x3d0] sm:$0xf]
    %v1234 = vld [vmem:[%s4 + $0x3d4] sm:$0xf]
    %v1235 = vld [vmem:[%s4 + $0x3d8] sm:$0xf]
    %v1236 = vld [vmem:[%s4 + $0x3dc] sm:$0xf]
    %v1237 = vld [vmem:[%s4 + $0x3e0] sm:$0xf]
    %v1238 = vld [vmem:[%s4 + $0x3e4] sm:$0xf]
    %v1239 = vld [vmem:[%s4 + $0x3e8] sm:$0xf]
    %v1240 = vld [vmem:[%s4 + $0x3ec] sm:$0xf]
    %v1241 = vld [vmem:[%s4 + $0x3f0] sm:$0xf]
    %v1242 = vld [vmem:[%s4 + $0x3f4] sm:$0xf]
    %v1243 = vld [vmem:[%s4 + $0x3f8] sm:$0xf]
    %v1244 = vld [vmem:[%s4 + $0x3fc] sm:$0xf]
    %v1245 = vlaneseq
    %v1246 = vshrl.u32 %v1245, 7
    %v1247 = vsub.s32 3, %v1246
    %v1248 = vrot.slane %v33, %v1247
    %v1505 = vunpack.c.l.b16 %v989
    %v1506 = vunpack.c.l.b16 %v990
    %v1507 = vunpack.c.l.b16 %v991
    %v1508 = vunpack.c.l.b16 %v992
    %v1509 = vunpack.c.l.b16 %v993
    %v1510 = vunpack.c.l.b16 %v994
    %v1511 = vunpack.c.l.b16 %v995
    %v1512 = vunpack.c.l.b16 %v996
    %v1513 = vunpack.c.l.b16 %v997
    %v1514 = vunpack.c.l.b16 %v998
    %v1515 = vunpack.c.l.b16 %v999
    %v1516 = vunpack.c.l.b16 %v1000
    %v1517 = vunpack.c.l.b16 %v1001
    %v1518 = vunpack.c.l.b16 %v1002
    %v1519 = vunpack.c.l.b16 %v1003
    %v1520 = vunpack.c.l.b16 %v1004
    %v1521 = vunpack.c.l.b16 %v1005
    %v1522 = vunpack.c.l.b16 %v1006
    %v1523 = vunpack.c.l.b16 %v1007
    %v1524 = vunpack.c.l.b16 %v1008
    %v1525 = vunpack.c.l.b16 %v1009
    %v1526 = vunpack.c.l.b16 %v1010
    %v1527 = vunpack.c.l.b16 %v1011
    %v1528 = vunpack.c.l.b16 %v1012
    %v1529 = vunpack.c.l.b16 %v1013
    %v1530 = vunpack.c.l.b16 %v1014
    %v1531 = vunpack.c.l.b16 %v1015
    %v1532 = vunpack.c.l.b16 %v1016
    %v1533 = vunpack.c.l.b16 %v1017
    %v1534 = vunpack.c.l.b16 %v1018
    %v1535 = vunpack.c.l.b16 %v1019
    %v1536 = vunpack.c.l.b16 %v1020
    %v1537 = vunpack.c.l.b16 %v1021
    %v1538 = vunpack.c.l.b16 %v1022
    %v1539 = vunpack.c.l.b16 %v1023
    %v1540 = vunpack.c.l.b16 %v1024
    %v1541 = vunpack.c.l.b16 %v1025
    %v1542 = vunpack.c.l.b16 %v1026
    %v1543 = vunpack.c.l.b16 %v1027
    %v1544 = vunpack.c.l.b16 %v1028
    %v1545 = vunpack.c.l.b16 %v1029
    %v1546 = vunpack.c.l.b16 %v1030
    %v1547 = vunpack.c.l.b16 %v1031
    %v1548 = vunpack.c.l.b16 %v1032
    %v1549 = vunpack.c.l.b16 %v1033
    %v1550 = vunpack.c.l.b16 %v1034
    %v1551 = vunpack.c.l.b16 %v1035
    %v1552 = vunpack.c.l.b16 %v1036
    %v1553 = vunpack.c.l.b16 %v1037
    %v1554 = vunpack.c.l.b16 %v1038
    %v1555 = vunpack.c.l.b16 %v1039
    %v1556 = vunpack.c.l.b16 %v1040
    %v1557 = vunpack.c.l.b16 %v1041
    %v1558 = vunpack.c.l.b16 %v1042
    %v1559 = vunpack.c.l.b16 %v1043
    %v1560 = vunpack.c.l.b16 %v1044
    %v1561 = vunpack.c.l.b16 %v1045
    %v1562 = vunpack.c.l.b16 %v1046
    %v1563 = vunpack.c.l.b16 %v1047
    %v1564 = vunpack.c.l.b16 %v1048
    %v1565 = vunpack.c.l.b16 %v1049
    %v1566 = vunpack.c.l.b16 %v1050
    %v1567 = vunpack.c.l.b16 %v1051
    %v1568 = vunpack.c.l.b16 %v1052
    %v1569 = vunpack.c.l.b16 %v1053
    %v1570 = vunpack.c.l.b16 %v1054
    %v1571 = vunpack.c.l.b16 %v1055
    %v1572 = vunpack.c.l.b16 %v1056
    %v1573 = vunpack.c.l.b16 %v1057
    %v1574 = vunpack.c.l.b16 %v1058
    %v1575 = vunpack.c.l.b16 %v1059
    %v1576 = vunpack.c.l.b16 %v1060
    %v1577 = vunpack.c.l.b16 %v1061
    %v1578 = vunpack.c.l.b16 %v1062
    %v1579 = vunpack.c.l.b16 %v1063
    %v1580 = vunpack.c.l.b16 %v1064
    %v1581 = vunpack.c.l.b16 %v1065
    %v1582 = vunpack.c.l.b16 %v1066
    %v1583 = vunpack.c.l.b16 %v1067
    %v1584 = vunpack.c.l.b16 %v1068
    %v1585 = vunpack.c.l.b16 %v1069
    %v1586 = vunpack.c.l.b16 %v1070
    %v1587 = vunpack.c.l.b16 %v1071
    %v1588 = vunpack.c.l.b16 %v1072
    %v1589 = vunpack.c.l.b16 %v1073
    %v1590 = vunpack.c.l.b16 %v1074
    %v1591 = vunpack.c.l.b16 %v1075
    %v1592 = vunpack.c.l.b16 %v1076
    %v1593 = vunpack.c.l.b16 %v1077
    %v1594 = vunpack.c.l.b16 %v1078
    %v1595 = vunpack.c.l.b16 %v1079
    %v1596 = vunpack.c.l.b16 %v1080
    %v1597 = vunpack.c.l.b16 %v1081
    %v1598 = vunpack.c.l.b16 %v1082
    %v1599 = vunpack.c.l.b16 %v1083
    %v1600 = vunpack.c.l.b16 %v1084
    %v1601 = vunpack.c.l.b16 %v1085
    %v1602 = vunpack.c.l.b16 %v1086
    %v1603 = vunpack.c.l.b16 %v1087
    %v1604 = vunpack.c.l.b16 %v1088
    %v1605 = vunpack.c.l.b16 %v1089
    %v1606 = vunpack.c.l.b16 %v1090
    %v1607 = vunpack.c.l.b16 %v1091
    %v1608 = vunpack.c.l.b16 %v1092
    %v1609 = vunpack.c.l.b16 %v1093
    %v1610 = vunpack.c.l.b16 %v1094
    %v1611 = vunpack.c.l.b16 %v1095
    %v1612 = vunpack.c.l.b16 %v1096
    %v1613 = vunpack.c.l.b16 %v1097
    %v1614 = vunpack.c.l.b16 %v1098
    %v1615 = vunpack.c.l.b16 %v1099
    %v1616 = vunpack.c.l.b16 %v1100
    %v1617 = vunpack.c.l.b16 %v1101
    %v1618 = vunpack.c.l.b16 %v1102
    %v1619 = vunpack.c.l.b16 %v1103
    %v1620 = vunpack.c.l.b16 %v1104
    %v1621 = vunpack.c.l.b16 %v1105
    %v1622 = vunpack.c.l.b16 %v1106
    %v1623 = vunpack.c.l.b16 %v1107
    %v1624 = vunpack.c.l.b16 %v1108
    %v1625 = vunpack.c.l.b16 %v1109
    %v1626 = vunpack.c.l.b16 %v1110
    %v1627 = vunpack.c.l.b16 %v1111
    %v1628 = vunpack.c.l.b16 %v1112
    %v1629 = vunpack.c.l.b16 %v1113
    %v1630 = vunpack.c.l.b16 %v1114
    %v1631 = vunpack.c.l.b16 %v1115
    %v1632 = vunpack.c.l.b16 %v1116
    %v1633 = vunpack.c.l.b16 %v1117
    %v1634 = vunpack.c.l.b16 %v1118
    %v1635 = vunpack.c.l.b16 %v1119
    %v1636 = vunpack.c.l.b16 %v1120
    %v1637 = vunpack.c.l.b16 %v1121
    %v1638 = vunpack.c.l.b16 %v1122
    %v1639 = vunpack.c.l.b16 %v1123
    %v1640 = vunpack.c.l.b16 %v1124
    %v1641 = vunpack.c.l.b16 %v1125
    %v1642 = vunpack.c.l.b16 %v1126
    %v1643 = vunpack.c.l.b16 %v1127
    %v1644 = vunpack.c.l.b16 %v1128
    %v1645 = vunpack.c.l.b16 %v1129
    %v1646 = vunpack.c.l.b16 %v1130
    %v1647 = vunpack.c.l.b16 %v1131
    %v1648 = vunpack.c.l.b16 %v1132
    %v1649 = vunpack.c.l.b16 %v1133
    %v1650 = vunpack.c.l.b16 %v1134
    %v1651 = vunpack.c.l.b16 %v1135
    %v1652 = vunpack.c.l.b16 %v1136
    %v1653 = vunpack.c.l.b16 %v1137
    %v1654 = vunpack.c.l.b16 %v1138
    %v1655 = vunpack.c.l.b16 %v1139
    %v1656 = vunpack.c.l.b16 %v1140
    %v1657 = vunpack.c.l.b16 %v1141
    %v1658 = vunpack.c.l.b16 %v1142
    %v1659 = vunpack.c.l.b16 %v1143
    %v1660 = vunpack.c.l.b16 %v1144
    %v1661 = vunpack.c.l.b16 %v1145
    %v1662 = vunpack.c.l.b16 %v1146
    %v1663 = vunpack.c.l.b16 %v1147
    %v1664 = vunpack.c.l.b16 %v1148
    %v1665 = vunpack.c.l.b16 %v1149
    %v1666 = vunpack.c.l.b16 %v1150
    %v1667 = vunpack.c.l.b16 %v1151
    %v1668 = vunpack.c.l.b16 %v1152
    %v1669 = vunpack.c.l.b16 %v1153
    %v1670 = vunpack.c.l.b16 %v1154
    %v1671 = vunpack.c.l.b16 %v1155
    %v1672 = vunpack.c.l.b16 %v1156
    %v1673 = vunpack.c.l.b16 %v1157
    %v1674 = vunpack.c.l.b16 %v1158
    %v1675 = vunpack.c.l.b16 %v1159
    %v1676 = vunpack.c.l.b16 %v1160
    %v1677 = vunpack.c.l.b16 %v1161
    %v1678 = vunpack.c.l.b16 %v1162
    %v1679 = vunpack.c.l.b16 %v1163
    %v1680 = vunpack.c.l.b16 %v1164
    %v1681 = vunpack.c.l.b16 %v1165
    %v1682 = vunpack.c.l.b16 %v1166
    %v1683 = vunpack.c.l.b16 %v1167
    %v1684 = vunpack.c.l.b16 %v1168
    %v1685 = vunpack.c.l.b16 %v1169
    %v1686 = vunpack.c.l.b16 %v1170
    %v1687 = vunpack.c.l.b16 %v1171
    %v1688 = vunpack.c.l.b16 %v1172
    %v1689 = vunpack.c.l.b16 %v1173
    %v1690 = vunpack.c.l.b16 %v1174
    %v1691 = vunpack.c.l.b16 %v1175
    %v1692 = vunpack.c.l.b16 %v1176
    %v1693 = vunpack.c.l.b16 %v1177
    %v1694 = vunpack.c.l.b16 %v1178
    %v1695 = vunpack.c.l.b16 %v1179
    %v1696 = vunpack.c.l.b16 %v1180
    %v1697 = vunpack.c.l.b16 %v1181
    %v1698 = vunpack.c.l.b16 %v1182
    %v1699 = vunpack.c.l.b16 %v1183
    %v1700 = vunpack.c.l.b16 %v1184
    %v1701 = vunpack.c.l.b16 %v1185
    %v1702 = vunpack.c.l.b16 %v1186
    %v1703 = vunpack.c.l.b16 %v1187
    %v1704 = vunpack.c.l.b16 %v1188
    %v1705 = vunpack.c.l.b16 %v1189
    %v1706 = vunpack.c.l.b16 %v1190
    %v1707 = vunpack.c.l.b16 %v1191
    %v1708 = vunpack.c.l.b16 %v1192
    %v1709 = vunpack.c.l.b16 %v1193
    %v1710 = vunpack.c.l.b16 %v1194
    %v1711 = vunpack.c.l.b16 %v1195
    %v1712 = vunpack.c.l.b16 %v1196
    %v1713 = vunpack.c.l.b16 %v1197
    %v1714 = vunpack.c.l.b16 %v1198
    %v1715 = vunpack.c.l.b16 %v1199
    %v1716 = vunpack.c.l.b16 %v1200
    %v1717 = vunpack.c.l.b16 %v1201
    %v1718 = vunpack.c.l.b16 %v1202
    %v1719 = vunpack.c.l.b16 %v1203
    %v1720 = vunpack.c.l.b16 %v1204
    %v1721 = vunpack.c.l.b16 %v1205
    %v1722 = vunpack.c.l.b16 %v1206
    %v1723 = vunpack.c.l.b16 %v1207
    %v1724 = vunpack.c.l.b16 %v1208
    %v1725 = vunpack.c.l.b16 %v1209
    %v1726 = vunpack.c.l.b16 %v1210
    %v1727 = vunpack.c.l.b16 %v1211
    %v1728 = vunpack.c.l.b16 %v1212
    %v1729 = vunpack.c.l.b16 %v1213
    %v1730 = vunpack.c.l.b16 %v1214
    %v1731 = vunpack.c.l.b16 %v1215
    %v1732 = vunpack.c.l.b16 %v1216
    %v1733 = vunpack.c.l.b16 %v1217
    %v1734 = vunpack.c.l.b16 %v1218
    %v1735 = vunpack.c.l.b16 %v1219
    %v1736 = vunpack.c.l.b16 %v1220
    %v1737 = vunpack.c.l.b16 %v1221
    %v1738 = vunpack.c.l.b16 %v1222
    %v1739 = vunpack.c.l.b16 %v1223
    %v1740 = vunpack.c.l.b16 %v1224
    %v1741 = vunpack.c.l.b16 %v1225
    %v1742 = vunpack.c.l.b16 %v1226
    %v1743 = vunpack.c.l.b16 %v1227
    %v1744 = vunpack.c.l.b16 %v1228
    %v1745 = vunpack.c.l.b16 %v1229
    %v1746 = vunpack.c.l.b16 %v1230
    %v1747 = vunpack.c.l.b16 %v1231
    %v1748 = vunpack.c.l.b16 %v1232
    %v1749 = vunpack.c.l.b16 %v1233
    %v1750 = vunpack.c.l.b16 %v1234
    %v1751 = vunpack.c.l.b16 %v1235
    %v1752 = vunpack.c.l.b16 %v1236
    %v1753 = vunpack.c.l.b16 %v1237
    %v1754 = vunpack.c.l.b16 %v1238
    %v1755 = vunpack.c.l.b16 %v1239
    %v1756 = vunpack.c.l.b16 %v1240
    %v1757 = vunpack.c.l.b16 %v1241
    %v1758 = vunpack.c.l.b16 %v1242
    %v1759 = vunpack.c.l.b16 %v1243
    %v1760 = vunpack.c.l.b16 %v1244
    %v1761 = vpack.c.b16 %v1506, %v1505
    %v1762 = vpack.c.b16 %v1508, %v1507
    %v1763 = vpack.c.b16 %v1510, %v1509
    %v1764 = vpack.c.b16 %v1512, %v1511
    %v1765 = vpack.c.b16 %v1514, %v1513
    %v1766 = vpack.c.b16 %v1516, %v1515
    %v1767 = vpack.c.b16 %v1518, %v1517
    %v1768 = vpack.c.b16 %v1520, %v1519
    %v1769 = vpack.c.b16 %v1522, %v1521
    %v1770 = vpack.c.b16 %v1524, %v1523
    %v1771 = vpack.c.b16 %v1526, %v1525
    %v1772 = vpack.c.b16 %v1528, %v1527
    %v1773 = vpack.c.b16 %v1530, %v1529
    %v1774 = vpack.c.b16 %v1532, %v1531
    %v1775 = vpack.c.b16 %v1534, %v1533
    %v1776 = vpack.c.b16 %v1536, %v1535
    %v1777 = vpack.c.b16 %v1538, %v1537
    %v1778 = vpack.c.b16 %v1540, %v1539
    %v1779 = vpack.c.b16 %v1542, %v1541
    %v1780 = vpack.c.b16 %v1544, %v1543
    %v1781 = vpack.c.b16 %v1546, %v1545
    %v1782 = vpack.c.b16 %v1548, %v1547
    %v1783 = vpack.c.b16 %v1550, %v1549
    %v1784 = vpack.c.b16 %v1552, %v1551
    %v1785 = vpack.c.b16 %v1554, %v1553
    %v1786 = vpack.c.b16 %v1556, %v1555
    %v1787 = vpack.c.b16 %v1558, %v1557
    %v1788 = vpack.c.b16 %v1560, %v1559
    %v1789 = vpack.c.b16 %v1562, %v1561
    %v1790 = vpack.c.b16 %v1564, %v1563
    %v1791 = vpack.c.b16 %v1566, %v1565
    %v1792 = vpack.c.b16 %v1568, %v1567
    %v1793 = vpack.c.b16 %v1570, %v1569
    %v1794 = vpack.c.b16 %v1572, %v1571
    %v1795 = vpack.c.b16 %v1574, %v1573
    %v1796 = vpack.c.b16 %v1576, %v1575
    %v1797 = vpack.c.b16 %v1578, %v1577
    %v1798 = vpack.c.b16 %v1580, %v1579
    %v1799 = vpack.c.b16 %v1582, %v1581
    %v1800 = vpack.c.b16 %v1584, %v1583
    %v1801 = vpack.c.b16 %v1586, %v1585
    %v1802 = vpack.c.b16 %v1588, %v1587
    %v1803 = vpack.c.b16 %v1590, %v1589
    %v1804 = vpack.c.b16 %v1592, %v1591
    %v1805 = vpack.c.b16 %v1594, %v1593
    %v1806 = vpack.c.b16 %v1596, %v1595
    %v1807 = vpack.c.b16 %v1598, %v1597
    %v1808 = vpack.c.b16 %v1600, %v1599
    %v1809 = vpack.c.b16 %v1602, %v1601
    %v1810 = vpack.c.b16 %v1604, %v1603
    %v1811 = vpack.c.b16 %v1606, %v1605
    %v1812 = vpack.c.b16 %v1608, %v1607
    %v1813 = vpack.c.b16 %v1610, %v1609
    %v1814 = vpack.c.b16 %v1612, %v1611
    %v1815 = vpack.c.b16 %v1614, %v1613
    %v1816 = vpack.c.b16 %v1616, %v1615
    %v1817 = vpack.c.b16 %v1618, %v1617
    %v1818 = vpack.c.b16 %v1620, %v1619
    %v1819 = vpack.c.b16 %v1622, %v1621
    %v1820 = vpack.c.b16 %v1624, %v1623
    %v1821 = vpack.c.b16 %v1626, %v1625
    %v1822 = vpack.c.b16 %v1628, %v1627
    %v1823 = vpack.c.b16 %v1630, %v1629
    %v1824 = vpack.c.b16 %v1632, %v1631
    %v1825 = vpack.c.b16 %v1634, %v1633
    %v1826 = vpack.c.b16 %v1636, %v1635
    %v1827 = vpack.c.b16 %v1638, %v1637
    %v1828 = vpack.c.b16 %v1640, %v1639
    %v1829 = vpack.c.b16 %v1642, %v1641
    %v1830 = vpack.c.b16 %v1644, %v1643
    %v1831 = vpack.c.b16 %v1646, %v1645
    %v1832 = vpack.c.b16 %v1648, %v1647
    %v1833 = vpack.c.b16 %v1650, %v1649
    %v1834 = vpack.c.b16 %v1652, %v1651
    %v1835 = vpack.c.b16 %v1654, %v1653
    %v1836 = vpack.c.b16 %v1656, %v1655
    %v1837 = vpack.c.b16 %v1658, %v1657
    %v1838 = vpack.c.b16 %v1660, %v1659
    %v1839 = vpack.c.b16 %v1662, %v1661
    %v1840 = vpack.c.b16 %v1664, %v1663
    %v1841 = vpack.c.b16 %v1666, %v1665
    %v1842 = vpack.c.b16 %v1668, %v1667
    %v1843 = vpack.c.b16 %v1670, %v1669
    %v1844 = vpack.c.b16 %v1672, %v1671
    %v1845 = vpack.c.b16 %v1674, %v1673
    %v1846 = vpack.c.b16 %v1676, %v1675
    %v1847 = vpack.c.b16 %v1678, %v1677
    %v1848 = vpack.c.b16 %v1680, %v1679
    %v1849 = vpack.c.b16 %v1682, %v1681
    %v1850 = vpack.c.b16 %v1684, %v1683
    %v1851 = vpack.c.b16 %v1686, %v1685
    %v1852 = vpack.c.b16 %v1688, %v1687
    %v1853 = vpack.c.b16 %v1690, %v1689
    %v1854 = vpack.c.b16 %v1692, %v1691
    %v1855 = vpack.c.b16 %v1694, %v1693
    %v1856 = vpack.c.b16 %v1696, %v1695
    %v1857 = vpack.c.b16 %v1698, %v1697
    %v1858 = vpack.c.b16 %v1700, %v1699
    %v1859 = vpack.c.b16 %v1702, %v1701
    %v1860 = vpack.c.b16 %v1704, %v1703
    %v1861 = vpack.c.b16 %v1706, %v1705
    %v1862 = vpack.c.b16 %v1708, %v1707
    %v1863 = vpack.c.b16 %v1710, %v1709
    %v1864 = vpack.c.b16 %v1712, %v1711
    %v1865 = vpack.c.b16 %v1714, %v1713
    %v1866 = vpack.c.b16 %v1716, %v1715
    %v1867 = vpack.c.b16 %v1718, %v1717
    %v1868 = vpack.c.b16 %v1720, %v1719
    %v1869 = vpack.c.b16 %v1722, %v1721
    %v1870 = vpack.c.b16 %v1724, %v1723
    %v1871 = vpack.c.b16 %v1726, %v1725
    %v1872 = vpack.c.b16 %v1728, %v1727
    %v1873 = vpack.c.b16 %v1730, %v1729
    %v1874 = vpack.c.b16 %v1732, %v1731
    %v1875 = vpack.c.b16 %v1734, %v1733
    %v1876 = vpack.c.b16 %v1736, %v1735
    %v1877 = vpack.c.b16 %v1738, %v1737
    %v1878 = vpack.c.b16 %v1740, %v1739
    %v1879 = vpack.c.b16 %v1742, %v1741
    %v1880 = vpack.c.b16 %v1744, %v1743
    %v1881 = vpack.c.b16 %v1746, %v1745
    %v1882 = vpack.c.b16 %v1748, %v1747
    %v1883 = vpack.c.b16 %v1750, %v1749
    %v1884 = vpack.c.b16 %v1752, %v1751
    %v1885 = vpack.c.b16 %v1754, %v1753
    %v1886 = vpack.c.b16 %v1756, %v1755
    %v1887 = vpack.c.b16 %v1758, %v1757
    %v1888 = vpack.c.b16 %v1760, %v1759
    %2017 = vmatprep.subr.bf16.mxu0 0
    %2018 = vmatpush1.bf16.msra.mxu0 %v1768
    %2019 = vmatprep.subr.bf16.mxu0 0
    %2020 = vmatpush1.bf16.msra.mxu0 %v1767
    %2021 = vmatprep.subr.bf16.mxu0 0
    %2022 = vmatpush1.bf16.msra.mxu0 %v1766
    %2023 = vmatprep.subr.bf16.mxu0 0
    %2024 = vmatpush1.bf16.msra.mxu0 %v1765
    %2025 = vmatprep.subr.bf16.mxu0 0
    %2026 = vmatpush1.bf16.msra.mxu0 %v1764
    %2027 = vmatprep.subr.bf16.mxu0 0
    %2028 = vmatpush1.bf16.msra.mxu0 %v1763
    %2029 = vmatprep.subr.bf16.mxu0 0
    %2030 = vmatpush1.bf16.msra.mxu0 %v1762
    %2031 = vmatprep.subr.bf16.mxu0 0
    %2032 = vmatpush1.bf16.msra.mxu0 %v1761
    %2033 = vmatprep.subr.bf16.mxu0 0
    %2034 = vmatpush2.bf16.msra.mxu0 %v1776
    %2035 = vmatprep.subr.bf16.mxu0 0
    %2036 = vmatpush2.bf16.msra.mxu0 %v1775
    %2037 = vmatprep.subr.bf16.mxu0 0
    %2038 = vmatpush2.bf16.msra.mxu0 %v1774
    %2039 = vmatprep.subr.bf16.mxu0 0
    %2040 = vmatpush2.bf16.msra.mxu0 %v1773
    %2041 = vmatprep.subr.bf16.mxu0 0
    %2042 = vmatpush2.bf16.msra.mxu0 %v1772
    %2043 = vmatprep.subr.bf16.mxu0 0
    %2044 = vmatpush2.bf16.msra.mxu0 %v1771
    %2045 = vmatprep.subr.bf16.mxu0 0
    %2046 = vmatpush2.bf16.msra.mxu0 %v1770
    %2047 = vmatprep.subr.bf16.mxu0 0
    %2048 = vmatpush2.bf16.msra.mxu0 %v1769
    %2049 = vmatprep.mubr.bf16.mxu0 %v958
    %2050 = vmatmul.mubr.bf16.gmra.mxu0 %v957
    %v2051 = vpop.f32.mrf.mxu0
    %v2052 = vadd.f32 %v1248, %v2051
    %v2053 = vpop.f32.mrf.mxu0
    %v2054 = vpop.f32.mrf.mxu0
    %v2055 = vadd.f32 %v1248, %v2054
    %v2056 = vpop.f32.mrf.mxu0
    %2057 = vmatprep.mubr.bf16.mxu0 %v974
    %2058 = vmatmul.mubr.bf16.gmra.mxu0 %v973
    %v2059 = vpop.f32.mrf.mxu0
    %v2060 = vadd.f32 %v1248, %v2059
    %v2061 = vpop.f32.mrf.mxu0
    %v2062 = vpop.f32.mrf.mxu0
    %v2063 = vadd.f32 %v1248, %v2062
    %v2064 = vpop.f32.mrf.mxu0
    %2065 = vdwg.mxu0
    %2066 = vmatprep.subr.bf16.mxu0 0
    %2067 = vmatpush1.bf16.msra.mxu0 %v1784
    %2068 = vmatprep.subr.bf16.mxu0 0
    %2069 = vmatpush1.bf16.msra.mxu0 %v1783
    %2070 = vmatprep.subr.bf16.mxu0 0
    %2071 = vmatpush1.bf16.msra.mxu0 %v1782
    %2072 = vmatprep.subr.bf16.mxu0 0
    %2073 = vmatpush1.bf16.msra.mxu0 %v1781
    %2074 = vmatprep.subr.bf16.mxu0 0
    %2075 = vmatpush1.bf16.msra.mxu0 %v1780
    %2076 = vmatprep.subr.bf16.mxu0 0
    %2077 = vmatpush1.bf16.msra.mxu0 %v1779
    %2078 = vmatprep.subr.bf16.mxu0 0
    %2079 = vmatpush1.bf16.msra.mxu0 %v1778
    %2080 = vmatprep.subr.bf16.mxu0 0
    %2081 = vmatpush1.bf16.msra.mxu0 %v1777
    %2082 = vmatprep.subr.bf16.mxu0 0
    %2083 = vmatpush2.bf16.msra.mxu0 %v1792
    %2084 = vmatprep.subr.bf16.mxu0 0
    %2085 = vmatpush2.bf16.msra.mxu0 %v1791
    %2086 = vmatprep.subr.bf16.mxu0 0
    %2087 = vmatpush2.bf16.msra.mxu0 %v1790
    %2088 = vmatprep.subr.bf16.mxu0 0
    %2089 = vmatpush2.bf16.msra.mxu0 %v1789
    %2090 = vmatprep.subr.bf16.mxu0 0
    %2091 = vmatpush2.bf16.msra.mxu0 %v1788
    %2092 = vmatprep.subr.bf16.mxu0 0
    %2093 = vmatpush2.bf16.msra.mxu0 %v1787
    %2094 = vmatprep.subr.bf16.mxu0 0
    %2095 = vmatpush2.bf16.msra.mxu0 %v1786
    %2096 = vmatprep.subr.bf16.mxu0 0
    %2097 = vmatpush2.bf16.msra.mxu0 %v1785
    %2098 = vmatprep.mubr.bf16.mxu0 %v960
    %2099 = vmatmul.mubr.bf16.gmra.mxu0 %v959
    %v2100 = vpop.f32.mrf.mxu0
    %v2101 = vadd.f32 %v2052, %v2100
    %v2102 = vpop.f32.mrf.mxu0
    %v2103 = vpop.f32.mrf.mxu0
    %v2104 = vadd.f32 %v2055, %v2103
    %v2105 = vpop.f32.mrf.mxu0
    %2106 = vmatprep.mubr.bf16.mxu0 %v976
    %2107 = vmatmul.mubr.bf16.gmra.mxu0 %v975
    %v2108 = vpop.f32.mrf.mxu0
    %v2109 = vadd.f32 %v2060, %v2108
    %v2110 = vpop.f32.mrf.mxu0
    %v2111 = vpop.f32.mrf.mxu0
    %v2112 = vadd.f32 %v2063, %v2111
    %v2113 = vpop.f32.mrf.mxu0
    %2114 = vdwg.mxu0
    %2115 = vmatprep.subr.bf16.mxu0 0
    %2116 = vmatpush1.bf16.msra.mxu0 %v1800
    %2117 = vmatprep.subr.bf16.mxu0 0
    %2118 = vmatpush1.bf16.msra.mxu0 %v1799
    %2119 = vmatprep.subr.bf16.mxu0 0
    %2120 = vmatpush1.bf16.msra.mxu0 %v1798
    %2121 = vmatprep.subr.bf16.mxu0 0
    %2122 = vmatpush1.bf16.msra.mxu0 %v1797
    %2123 = vmatprep.subr.bf16.mxu0 0
    %2124 = vmatpush1.bf16.msra.mxu0 %v1796
    %2125 = vmatprep.subr.bf16.mxu0 0
    %2126 = vmatpush1.bf16.msra.mxu0 %v1795
    %2127 = vmatprep.subr.bf16.mxu0 0
    %2128 = vmatpush1.bf16.msra.mxu0 %v1794
    %2129 = vmatprep.subr.bf16.mxu0 0
    %2130 = vmatpush1.bf16.msra.mxu0 %v1793
    %2131 = vmatprep.subr.bf16.mxu0 0
    %2132 = vmatpush2.bf16.msra.mxu0 %v1808
    %2133 = vmatprep.subr.bf16.mxu0 0
    %2134 = vmatpush2.bf16.msra.mxu0 %v1807
    %2135 = vmatprep.subr.bf16.mxu0 0
    %2136 = vmatpush2.bf16.msra.mxu0 %v1806
    %2137 = vmatprep.subr.bf16.mxu0 0
    %2138 = vmatpush2.bf16.msra.mxu0 %v1805
    %2139 = vmatprep.subr.bf16.mxu0 0
    %2140 = vmatpush2.bf16.msra.mxu0 %v1804
    %2141 = vmatprep.subr.bf16.mxu0 0
    %2142 = vmatpush2.bf16.msra.mxu0 %v1803
    %2143 = vmatprep.subr.bf16.mxu0 0
    %2144 = vmatpush2.bf16.msra.mxu0 %v1802
    %2145 = vmatprep.subr.bf16.mxu0 0
    %2146 = vmatpush2.bf16.msra.mxu0 %v1801
    %2147 = vmatprep.mubr.bf16.mxu0 %v962
    %2148 = vmatmul.mubr.bf16.gmra.mxu0 %v961
    %v2149 = vpop.f32.mrf.mxu0
    %v2150 = vadd.f32 %v2101, %v2149
    %v2151 = vpop.f32.mrf.mxu0
    %v2152 = vpop.f32.mrf.mxu0
    %v2153 = vadd.f32 %v2104, %v2152
    %v2154 = vpop.f32.mrf.mxu0
    %2155 = vmatprep.mubr.bf16.mxu0 %v978
    %2156 = vmatmul.mubr.bf16.gmra.mxu0 %v977
    %v2157 = vpop.f32.mrf.mxu0
    %v2158 = vadd.f32 %v2109, %v2157
    %v2159 = vpop.f32.mrf.mxu0
    %v2160 = vpop.f32.mrf.mxu0
    %v2161 = vadd.f32 %v2112, %v2160
    %v2162 = vpop.f32.mrf.mxu0
    %2163 = vdwg.mxu0
    %2164 = vmatprep.subr.bf16.mxu0 0
    %2165 = vmatpush1.bf16.msra.mxu0 %v1816
    %2166 = vmatprep.subr.bf16.mxu0 0
    %2167 = vmatpush1.bf16.msra.mxu0 %v1815
    %2168 = vmatprep.subr.bf16.mxu0 0
    %2169 = vmatpush1.bf16.msra.mxu0 %v1814
    %2170 = vmatprep.subr.bf16.mxu0 0
    %2171 = vmatpush1.bf16.msra.mxu0 %v1813
    %2172 = vmatprep.subr.bf16.mxu0 0
    %2173 = vmatpush1.bf16.msra.mxu0 %v1812
    %2174 = vmatprep.subr.bf16.mxu0 0
    %2175 = vmatpush1.bf16.msra.mxu0 %v1811
    %2176 = vmatprep.subr.bf16.mxu0 0
    %2177 = vmatpush1.bf16.msra.mxu0 %v1810
    %2178 = vmatprep.subr.bf16.mxu0 0
    %2179 = vmatpush1.bf16.msra.mxu0 %v1809
    %2180 = vmatprep.subr.bf16.mxu0 0
    %2181 = vmatpush2.bf16.msra.mxu0 %v1824
    %2182 = vmatprep.subr.bf16.mxu0 0
    %2183 = vmatpush2.bf16.msra.mxu0 %v1823
    %2184 = vmatprep.subr.bf16.mxu0 0
    %2185 = vmatpush2.bf16.msra.mxu0 %v1822
    %2186 = vmatprep.subr.bf16.mxu0 0
    %2187 = vmatpush2.bf16.msra.mxu0 %v1821
    %2188 = vmatprep.subr.bf16.mxu0 0
    %2189 = vmatpush2.bf16.msra.mxu0 %v1820
    %2190 = vmatprep.subr.bf16.mxu0 0
    %2191 = vmatpush2.bf16.msra.mxu0 %v1819
    %2192 = vmatprep.subr.bf16.mxu0 0
    %2193 = vmatpush2.bf16.msra.mxu0 %v1818
    %2194 = vmatprep.subr.bf16.mxu0 0
    %2195 = vmatpush2.bf16.msra.mxu0 %v1817
    %2196 = vmatprep.mubr.bf16.mxu0 %v964
    %2197 = vmatmul.mubr.bf16.gmra.mxu0 %v963
    %v2198 = vpop.f32.mrf.mxu0
    %v2199 = vadd.f32 %v2150, %v2198
    %v2200 = vpop.f32.mrf.mxu0
    %v2201 = vpop.f32.mrf.mxu0
    %v2202 = vadd.f32 %v2153, %v2201
    %v2203 = vpop.f32.mrf.mxu0
    %2204 = vmatprep.mubr.bf16.mxu0 %v980
    %2205 = vmatmul.mubr.bf16.gmra.mxu0 %v979
    %v2206 = vpop.f32.mrf.mxu0
    %v2207 = vadd.f32 %v2158, %v2206
    %v2208 = vpop.f32.mrf.mxu0
    %v2209 = vpop.f32.mrf.mxu0
    %v2210 = vadd.f32 %v2161, %v2209
    %v2211 = vpop.f32.mrf.mxu0
    %2212 = vdwg.mxu0
    %2213 = vmatprep.subr.bf16.mxu0 0
    %2214 = vmatpush1.bf16.msra.mxu0 %v1832
    %2215 = vmatprep.subr.bf16.mxu0 0
    %2216 = vmatpush1.bf16.msra.mxu0 %v1831
    %2217 = vmatprep.subr.bf16.mxu0 0
    %2218 = vmatpush1.bf16.msra.mxu0 %v1830
    %2219 = vmatprep.subr.bf16.mxu0 0
    %2220 = vmatpush1.bf16.msra.mxu0 %v1829
    %2221 = vmatprep.subr.bf16.mxu0 0
    %2222 = vmatpush1.bf16.msra.mxu0 %v1828
    %2223 = vmatprep.subr.bf16.mxu0 0
    %2224 = vmatpush1.bf16.msra.mxu0 %v1827
    %2225 = vmatprep.subr.bf16.mxu0 0
    %2226 = vmatpush1.bf16.msra.mxu0 %v1826
    %2227 = vmatprep.subr.bf16.mxu0 0
    %2228 = vmatpush1.bf16.msra.mxu0 %v1825
    %2229 = vmatprep.subr.bf16.mxu0 0
    %2230 = vmatpush2.bf16.msra.mxu0 %v1840
    %2231 = vmatprep.subr.bf16.mxu0 0
    %2232 = vmatpush2.bf16.msra.mxu0 %v1839
    %2233 = vmatprep.subr.bf16.mxu0 0
    %2234 = vmatpush2.bf16.msra.mxu0 %v1838
    %2235 = vmatprep.subr.bf16.mxu0 0
    %2236 = vmatpush2.bf16.msra.mxu0 %v1837
    %2237 = vmatprep.subr.bf16.mxu0 0
    %2238 = vmatpush2.bf16.msra.mxu0 %v1836
    %2239 = vmatprep.subr.bf16.mxu0 0
    %2240 = vmatpush2.bf16.msra.mxu0 %v1835
    %2241 = vmatprep.subr.bf16.mxu0 0
    %2242 = vmatpush2.bf16.msra.mxu0 %v1834
    %2243 = vmatprep.subr.bf16.mxu0 0
    %2244 = vmatpush2.bf16.msra.mxu0 %v1833
    %2245 = vmatprep.mubr.bf16.mxu0 %v966
    %2246 = vmatmul.mubr.bf16.gmra.mxu0 %v965
    %v2247 = vpop.f32.mrf.mxu0
    %v2248 = vadd.f32 %v2199, %v2247
    %v2249 = vpop.f32.mrf.mxu0
    %v2250 = vpop.f32.mrf.mxu0
    %v2251 = vadd.f32 %v2202, %v2250
    %v2252 = vpop.f32.mrf.mxu0
    %2253 = vmatprep.mubr.bf16.mxu0 %v982
    %2254 = vmatmul.mubr.bf16.gmra.mxu0 %v981
    %v2255 = vpop.f32.mrf.mxu0
    %v2256 = vadd.f32 %v2207, %v2255
    %v2257 = vpop.f32.mrf.mxu0
    %v2258 = vpop.f32.mrf.mxu0
    %v2259 = vadd.f32 %v2210, %v2258
    %v2260 = vpop.f32.mrf.mxu0
    %2261 = vdwg.mxu0
    %2262 = vmatprep.subr.bf16.mxu0 0
    %2263 = vmatpush1.bf16.msra.mxu0 %v1848
    %2264 = vmatprep.subr.bf16.mxu0 0
    %2265 = vmatpush1.bf16.msra.mxu0 %v1847
    %2266 = vmatprep.subr.bf16.mxu0 0
    %2267 = vmatpush1.bf16.msra.mxu0 %v1846
    %2268 = vmatprep.subr.bf16.mxu0 0
    %2269 = vmatpush1.bf16.msra.mxu0 %v1845
    %2270 = vmatprep.subr.bf16.mxu0 0
    %2271 = vmatpush1.bf16.msra.mxu0 %v1844
    %2272 = vmatprep.subr.bf16.mxu0 0
    %2273 = vmatpush1.bf16.msra.mxu0 %v1843
    %2274 = vmatprep.subr.bf16.mxu0 0
    %2275 = vmatpush1.bf16.msra.mxu0 %v1842
    %2276 = vmatprep.subr.bf16.mxu0 0
    %2277 = vmatpush1.bf16.msra.mxu0 %v1841
    %2278 = vmatprep.subr.bf16.mxu0 0
    %2279 = vmatpush2.bf16.msra.mxu0 %v1856
    %2280 = vmatprep.subr.bf16.mxu0 0
    %2281 = vmatpush2.bf16.msra.mxu0 %v1855
    %2282 = vmatprep.subr.bf16.mxu0 0
    %2283 = vmatpush2.bf16.msra.mxu0 %v1854
    %2284 = vmatprep.subr.bf16.mxu0 0
    %2285 = vmatpush2.bf16.msra.mxu0 %v1853
    %2286 = vmatprep.subr.bf16.mxu0 0
    %2287 = vmatpush2.bf16.msra.mxu0 %v1852
    %2288 = vmatprep.subr.bf16.mxu0 0
    %2289 = vmatpush2.bf16.msra.mxu0 %v1851
    %2290 = vmatprep.subr.bf16.mxu0 0
    %2291 = vmatpush2.bf16.msra.mxu0 %v1850
    %2292 = vmatprep.subr.bf16.mxu0 0
    %2293 = vmatpush2.bf16.msra.mxu0 %v1849
    %2294 = vmatprep.mubr.bf16.mxu0 %v968
    %2295 = vmatmul.mubr.bf16.gmra.mxu0 %v967
    %v2296 = vpop.f32.mrf.mxu0
    %v2297 = vadd.f32 %v2248, %v2296
    %v2298 = vpop.f32.mrf.mxu0
    %v2299 = vpop.f32.mrf.mxu0
    %v2300 = vadd.f32 %v2251, %v2299
    %v2301 = vpop.f32.mrf.mxu0
    %2302 = vmatprep.mubr.bf16.mxu0 %v984
    %2303 = vmatmul.mubr.bf16.gmra.mxu0 %v983
    %v2304 = vpop.f32.mrf.mxu0
    %v2305 = vadd.f32 %v2256, %v2304
    %v2306 = vpop.f32.mrf.mxu0
    %v2307 = vpop.f32.mrf.mxu0
    %v2308 = vadd.f32 %v2259, %v2307
    %v2309 = vpop.f32.mrf.mxu0
    %2310 = vdwg.mxu0
    %2311 = vmatprep.subr.bf16.mxu0 0
    %2312 = vmatpush1.bf16.msra.mxu0 %v1864
    %2313 = vmatprep.subr.bf16.mxu0 0
    %2314 = vmatpush1.bf16.msra.mxu0 %v1863
    %2315 = vmatprep.subr.bf16.mxu0 0
    %2316 = vmatpush1.bf16.msra.mxu0 %v1862
    %2317 = vmatprep.subr.bf16.mxu0 0
    %2318 = vmatpush1.bf16.msra.mxu0 %v1861
    %2319 = vmatprep.subr.bf16.mxu0 0
    %2320 = vmatpush1.bf16.msra.mxu0 %v1860
    %2321 = vmatprep.subr.bf16.mxu0 0
    %2322 = vmatpush1.bf16.msra.mxu0 %v1859
    %2323 = vmatprep.subr.bf16.mxu0 0
    %2324 = vmatpush1.bf16.msra.mxu0 %v1858
    %2325 = vmatprep.subr.bf16.mxu0 0
    %2326 = vmatpush1.bf16.msra.mxu0 %v1857
    %2327 = vmatprep.subr.bf16.mxu0 0
    %2328 = vmatpush2.bf16.msra.mxu0 %v1872
    %2329 = vmatprep.subr.bf16.mxu0 0
    %2330 = vmatpush2.bf16.msra.mxu0 %v1871
    %2331 = vmatprep.subr.bf16.mxu0 0
    %2332 = vmatpush2.bf16.msra.mxu0 %v1870
    %2333 = vmatprep.subr.bf16.mxu0 0
    %2334 = vmatpush2.bf16.msra.mxu0 %v1869
    %2335 = vmatprep.subr.bf16.mxu0 0
    %2336 = vmatpush2.bf16.msra.mxu0 %v1868
    %2337 = vmatprep.subr.bf16.mxu0 0
    %2338 = vmatpush2.bf16.msra.mxu0 %v1867
    %2339 = vmatprep.subr.bf16.mxu0 0
    %2340 = vmatpush2.bf16.msra.mxu0 %v1866
    %2341 = vmatprep.subr.bf16.mxu0 0
    %2342 = vmatpush2.bf16.msra.mxu0 %v1865
    %2343 = vmatprep.mubr.bf16.mxu0 %v970
    %2344 = vmatmul.mubr.bf16.gmra.mxu0 %v969
    %v2345 = vpop.f32.mrf.mxu0
    %v2346 = vadd.f32 %v2297, %v2345
    %v2347 = vpop.f32.mrf.mxu0
    %v2348 = vpop.f32.mrf.mxu0
    %v2349 = vadd.f32 %v2300, %v2348
    %v2350 = vpop.f32.mrf.mxu0
    %2351 = vmatprep.mubr.bf16.mxu0 %v986
    %2352 = vmatmul.mubr.bf16.gmra.mxu0 %v985
    %v2353 = vpop.f32.mrf.mxu0
    %v2354 = vadd.f32 %v2305, %v2353
    %v2355 = vpop.f32.mrf.mxu0
    %v2356 = vpop.f32.mrf.mxu0
    %v2357 = vadd.f32 %v2308, %v2356
    %v2358 = vpop.f32.mrf.mxu0
    %2359 = vdwg.mxu0
    %2360 = vmatprep.subr.bf16.mxu0 0
    %2361 = vmatpush1.bf16.msra.mxu0 %v1880
    %2362 = vmatprep.subr.bf16.mxu0 0
    %2363 = vmatpush1.bf16.msra.mxu0 %v1879
    %2364 = vmatprep.subr.bf16.mxu0 0
    %2365 = vmatpush1.bf16.msra.mxu0 %v1878
    %2366 = vmatprep.subr.bf16.mxu0 0
    %2367 = vmatpush1.bf16.msra.mxu0 %v1877
    %2368 = vmatprep.subr.bf16.mxu0 0
    %2369 = vmatpush1.bf16.msra.mxu0 %v1876
    %2370 = vmatprep.subr.bf16.mxu0 0
    %2371 = vmatpush1.bf16.msra.mxu0 %v1875
    %2372 = vmatprep.subr.bf16.mxu0 0
    %2373 = vmatpush1.bf16.msra.mxu0 %v1874
    %2374 = vmatprep.subr.bf16.mxu0 0
    %2375 = vmatpush1.bf16.msra.mxu0 %v1873
    %2376 = vmatprep.subr.bf16.mxu0 0
    %2377 = vmatpush2.bf16.msra.mxu0 %v1888
    %2378 = vmatprep.subr.bf16.mxu0 0
    %2379 = vmatpush2.bf16.msra.mxu0 %v1887
    %2380 = vmatprep.subr.bf16.mxu0 0
    %2381 = vmatpush2.bf16.msra.mxu0 %v1886
    %2382 = vmatprep.subr.bf16.mxu0 0
    %2383 = vmatpush2.bf16.msra.mxu0 %v1885
    %2384 = vmatprep.subr.bf16.mxu0 0
    %2385 = vmatpush2.bf16.msra.mxu0 %v1884
    %2386 = vmatprep.subr.bf16.mxu0 0
    %2387 = vmatpush2.bf16.msra.mxu0 %v1883
    %2388 = vmatprep.subr.bf16.mxu0 0
    %2389 = vmatpush2.bf16.msra.mxu0 %v1882
    %2390 = vmatprep.subr.bf16.mxu0 0
    %2391 = vmatpush2.bf16.msra.mxu0 %v1881
    %2392 = vmatprep.mubr.bf16.mxu0 %v972
    %2393 = vmatmul.mubr.bf16.gmra.mxu0 %v971
    %v2394 = vpop.f32.mrf.mxu0
    %v2395 = vadd.f32 %v2346, %v2394
    %v2396 = vpop.f32.mrf.mxu0
    %v2397 = vpop.f32.mrf.mxu0
    %v2398 = vadd.f32 %v2349, %v2397
    %v2399 = vpop.f32.mrf.mxu0
    %2400 = vmatprep.mubr.bf16.mxu0 %v988
    %2401 = vmatmul.mubr.bf16.gmra.mxu0 %v987
    %v2402 = vpop.f32.mrf.mxu0
    %v2403 = vadd.f32 %v2354, %v2402
    %v2404 = vpop.f32.mrf.mxu0
    %v2405 = vpop.f32.mrf.mxu0
    %v2406 = vadd.f32 %v2357, %v2405
    %v2407 = vpop.f32.mrf.mxu0
    %2408 = vdwg.mxu0
    %v2409 = vadd.f32 %v181, %v2395
    %v2410 = vadd.f32 %v182, %v2398
    %v2411 = vadd.f32 %v183, %v2403
    %v2412 = vadd.f32 %v184, %v2406
    %v2413 = vsel %vm56, %v2409, 0.0
    %2414 = vadd.xlane.f32.xlu0 %v2413
    %v2415 = vpop.xlane.xlu0 %2414
    %v2416 = vsel %vm56, %v2410, 0.0
    %2417 = vadd.xlane.f32.xlu0 %v2416
    %v2418 = vpop.xlane.xlu0 %2417
    %v2419 = vsel %vm56, %v2411, 0.0
    %2420 = vadd.xlane.f32.xlu0 %v2419
    %v2421 = vpop.xlane.xlu0 %2420
    %v2422 = vsel %vm56, %v2412, 0.0
    %2423 = vadd.xlane.f32.xlu0 %v2422
    %v2424 = vpop.xlane.xlu0 %2423
    %v2425 = vmul.f32 %v2415, %v128
    %v2426 = vmul.f32 %v2418, %v128
    %v2427 = vmul.f32 %v2421, %v128
    %v2428 = vmul.f32 %v2424, %v128
    %v2429 = vsub.f32 %v2409, %v2425
    %v2430 = vsub.f32 %v2410, %v2426
    %v2431 = vsub.f32 %v2411, %v2427
    %v2432 = vsub.f32 %v2412, %v2428
    %v2433 = vmul.f32 %v2429, %v2429
    %v2434 = vmul.f32 %v2430, %v2430
    %v2435 = vmul.f32 %v2431, %v2431
    %v2436 = vmul.f32 %v2432, %v2432
    %v2437 = vsel %vm56, %v2433, 0.0
    %2438 = vadd.xlane.f32.xlu0 %v2437
    %v2439 = vpop.xlane.xlu0 %2438
    %v2440 = vsel %vm56, %v2434, 0.0
    %2441 = vadd.xlane.f32.xlu0 %v2440
    %v2442 = vpop.xlane.xlu0 %2441
    %v2443 = vsel %vm56, %v2435, 0.0
    %2444 = vadd.xlane.f32.xlu0 %v2443
    %v2445 = vpop.xlane.xlu0 %2444
    %v2446 = vsel %vm56, %v2436, 0.0
    %2447 = vadd.xlane.f32.xlu0 %v2446
    %v2448 = vpop.xlane.xlu0 %2447
    %v2449 = vmul.f32 %v2439, %v128
    %v2450 = vmul.f32 %v2442, %v128
    %v2451 = vmul.f32 %v2445, %v128
    %v2452 = vmul.f32 %v2448, %v128
    %v2453 = vadd.f32 %v2449, 1e-05
    %v2454 = vadd.f32 %v2450, 1e-05
    %v2455 = vadd.f32 %v2451, 1e-05
    %v2456 = vadd.f32 %v2452, 1e-05
    %v2457 = vrsqrt.pop %v2453
    %v2458 = vrsqrt.pop %v2454
    %v2459 = vrsqrt.pop %v2455
    %v2460 = vrsqrt.pop %v2456
    %v2461 = vmul.f32 %v2429, %v2457
    %v2462 = vmul.f32 %v2430, %v2458
    %v2463 = vmul.f32 %v2431, %v2459
    %v2464 = vmul.f32 %v2432, %v2460
    %v2465 = vlaneseq
    %v2466 = vshrl.u32 %v2465, 7
    %v2467 = vsub.s32 4, %v2466
    %v2468 = vrot.slane %v33, %v2467
    %v2469 = vmul.f32 %v2461, %v2468
    %v2470 = vmul.f32 %v2462, %v2468
    %v2471 = vmul.f32 %v2463, %v2468
    %v2472 = vmul.f32 %v2464, %v2468
    %v2473 = vsel %vm56, %v2469, 0.0
    %2474 = vadd.xlane.f32.xlu0 %v2473
    %v2475 = vpop.xlane.xlu0 %2474
    %v2476 = vsel %vm56, %v2470, 0.0
    %2477 = vadd.xlane.f32.xlu0 %v2476
    %v2478 = vpop.xlane.xlu0 %2477
    %v2479 = vsel %vm56, %v2471, 0.0
    %2480 = vadd.xlane.f32.xlu0 %v2479
    %v2481 = vpop.xlane.xlu0 %2480
    %v2482 = vsel %vm56, %v2472, 0.0
    %2483 = vadd.xlane.f32.xlu0 %v2482
    %v2484 = vpop.xlane.xlu0 %2483
    %s2485 = sld [smem:[#allocation2]]
    %v2486 = vstv %s2485
    %v2487 = vadd.f32 %v2475, %v2486
    %v2488 = vadd.f32 %v2478, %v2486
    %v2489 = vadd.f32 %v2481, %v2486
    %v2490 = vadd.f32 %v2484, %v2486
    %v2495 = vlaneseq
    %v2496 = vand.u32 %v2495, 127
    %v2497 = vlaneseq
    %v2498 = vshrl.u32 %v2497, 7
    %v2499 = vsub.s32 %v2496, %v2498
    %v2500 = vrot.slane %v2487, %v2499
    %v2501 = vadd.s32 %v2496, 4294967288
    %v2502 = vlaneseq
    %v2503 = vshrl.u32 %v2502, 7
    %v2504 = vsub.s32 %v2501, %v2503
    %v2505 = vrot.slane %v2488, %v2504
    %vm2506 = vcmask 130112
    %v2507 = vsel %vm2506, %v2505, %v2500
    %v2508 = vadd.s32 %v2496, 4294967280
    %v2509 = vlaneseq
    %v2510 = vshrl.u32 %v2509, 7
    %v2511 = vsub.s32 %v2508, %v2510
    %v2512 = vrot.slane %v2489, %v2511
    %vm2513 = vcmask 195712
    %v2514 = vsel %vm2513, %v2512, %v2507
    %v2515 = vadd.s32 %v2496, 4294967272
    %v2516 = vlaneseq
    %v2517 = vshrl.u32 %v2516, 7
    %v2518 = vsub.s32 %v2515, %v2517
    %v2519 = vrot.slane %v2490, %v2518
    %vm2520 = vcmask 261312
    %v2521 = vsel %vm2520, %v2519, %v2514
    %vm2523 = vcmask 253952
    %2524 = vst.msk [vmem:[#allocation3] sm:$0x1] %vm2523, %v2521
    // Predicated region
    $region30: #{tpu_custom_call.1} parent=1 // pred_check
      _
    $region31: #{tpu_custom_call.1} parent=1 // pred_check_branch
      %2526 = sbr.rel (0) target = $region33
    $region32: #{tpu_custom_call.1} parent=1 // pred_region
      %s2528 = ssub.s32 16, 16
      %2529 = vsyncadd [#allocation4], %s2528
      %s2531 = sshll.u32 [#allocation3], 4
      %s2532 = int_to_ptr.vmem [resolvable:$true] %s2531
      %2534 = dma.vmem_to_hbm [thread:$0]  %s2532, 16, %s7, [#allocation4]
    $region33: #{tpu_custom_call.1} parent=1 // pred_fallthru
      _
    // Predicated region
    $region34: #{tpu_custom_call.1} parent=1 // pred_check
      _
    $region35: #{tpu_custom_call.1} parent=1 // pred_check_branch
      %2536 = sbr.rel (0) target = $region37
    $region36: #{tpu_custom_call.1} parent=1 // pred_region
      %2537 = dma.done [#allocation4], 16
    $region37: #{tpu_custom_call.1} parent=1 // pred_fallthru
      _
    %2538 = vsyncpa [#allocation4], 1

</llo_original>
